<compile_context>
chip_gen: v6e
topology: v6e:2x2x1
jax: 0.10.0
libtpu: 0.0.40
codegen_flags: <defaults>
</compile_context>

<pallas_src>
import functools

import jax
import jax.numpy as jnp
from jax.experimental import pallas as pl
from jax.experimental.pallas import tpu as pltpu


def _conv_accum(x_ref, w_ref, *, k, cp, wp, m):
    """3x3 'same' conv on one flattened, zero-padded image.

    x_ref block: (1, Cp, L) image flattened over (padded_row, Wp); the wrapper
                 guarantees L >= m + (K-1)*Wp + (K-1) so every tap slice fits.
    w_ref      : (Cout, K*K*Cp) weights, tap-major (kh, kw, c).
    Returns (Cout, m) f32 with m = H*Wp.  Columns with (p % Wp) >= W are junk
    from the width padding; callers mask (stats) or crop (output) them.
    """
    xt = x_ref[0]                                    # (Cp, L)
    acc = None
    for kh in range(k):
        for kw in range(k):
            off = kh * wp + kw                       # static flat tap offset
            tap = xt[:, off:off + m]                 # (Cp, m) shifted view
            t = kh * k + kw
            w_tap = w_ref[:, t * cp:(t + 1) * cp]    # (Cout, Cp)
            d = jnp.dot(w_tap, tap, preferred_element_type=jnp.float32)
            acc = d if acc is None else acc + d
    return acc


def _conv_stats_kernel(x_ref, w_ref, mask_ref, sum_ref, sq_ref, *, k, cp, wp, m):
    """Pass 1: conv -> per-channel sum / sum-of-squares, accumulated across the grid."""
    @pl.when(pl.program_id(0) == 0)
    def _():
        sum_ref[...] = jnp.zeros_like(sum_ref)
        sq_ref[...] = jnp.zeros_like(sq_ref)

    conv = _conv_accum(x_ref, w_ref, k=k, cp=cp, wp=wp, m=m)   # (Cout, m) f32
    cm = conv * mask_ref[...]                                  # mask junk cols once, reuse
    sum_ref[...] += jnp.sum(cm, axis=1, keepdims=True)         # (Cout, 1)
    sq_ref[...] += jnp.sum(cm * cm, axis=1, keepdims=True)     # (Cout, 1)


def _conv_norm_kernel(x_ref, w_ref, scale_ref, shift_ref, out_ref, *, k, cp, wp, m):
    """Pass 2: conv (recomputed) fused with the folded BN scale/shift epilogue."""
    conv = _conv_accum(x_ref, w_ref, k=k, cp=cp, wp=wp, m=m)   # (Cout, m) f32
    out_ref[0] = conv * scale_ref[...] + shift_ref[...]        # lane-dense store


def two_module_forward(x_nchw, weight_oihw, bias, gamma, beta, *,
                       eps=1e-5, compute_dtype=jnp.bfloat16):
    # `bias` is intentionally unused: training-mode BatchNorm subtracts the batch
    # mean right after the conv, so a per-channel conv bias cancels exactly.
    del bias
    N, Cin, H, W = x_nchw.shape
    Cout, _, K, _ = weight_oihw.shape
    pad = (K - 1) // 2

    # Lane-density: round Wp up to a multiple of 128 when the waste is <= ~33%;
    # for tiny W keep W + 2*pad and accept a small masked tail store.
    wp_min = W + 2 * pad
    wp_128 = ((wp_min + 127) // 128) * 128
    Wp = wp_128 if wp_128 * 3 <= wp_min * 4 else wp_min

    # Sublane-align channels to 8 (no-op for realistic channel counts).
    Cp = ((Cin + 7) // 8) * 8

    m = H * Wp                         # lane dim of each conv tile (whole image)
    Hp = H + 2 * pad + 1               # +1 bottom zero row: every tap slice in bounds
    L = Hp * Wp

    # ---- glue (plain JAX): zero-pad once, flatten (Hp, Wp) with a free reshape ----
    xpad = jnp.pad(
        x_nchw,
        ((0, 0), (0, Cp - Cin), (pad, pad + 1), (pad, Wp - W - pad)))
    xflat = xpad.reshape(N, Cp, L).astype(compute_dtype)       # contiguous -> no copy

    # Weights: (Cout, Cin, K, K) -> (Cout, K*K*Cp), tap-major to match the kernel.
    w_p = jnp.pad(weight_oihw, ((0, 0), (0, Cp - Cin), (0, 0), (0, 0)))
    w2 = jnp.transpose(w_p, (0, 2, 3, 1)).reshape(Cout, K * K * Cp)
    w2 = w2.astype(compute_dtype)

    # Valid-output-column mask over a flattened image (junk cols: p % Wp >= W).
    mask = ((jnp.arange(m) % Wp) < W).astype(jnp.float32).reshape(1, m)

    x_spec = pl.BlockSpec((1, Cp, L), lambda n: (n, 0, 0))
    w_spec = pl.BlockSpec((Cout, K * K * Cp), lambda n: (0, 0))

    # VMEM/step ~ 2x (input block + output block); comfortably under the scoped
    # limit for the channel counts this layer is used at on v5e/v6e/v7x.
    vmem_limit = 32 * 1024 * 1024

    # ---- pass 1: conv -> per-channel sum / sumsq, VMEM-resident accumulator ----
    stats_kernel = functools.partial(_conv_stats_kernel, k=K, cp=Cp, wp=Wp, m=m)
    tot_sum, tot_sq = pl.pallas_call(
        stats_kernel,
        out_shape=(jax.ShapeDtypeStruct((Cout, 1), jnp.float32),
                   jax.ShapeDtypeStruct((Cout, 1), jnp.float32)),
        grid=(N,),
        in_specs=[x_spec, w_spec, pl.BlockSpec((1, m), lambda n: (0, 0))],
        out_specs=(pl.BlockSpec((Cout, 1), lambda n: (0, 0)),
                   pl.BlockSpec((Cout, 1), lambda n: (0, 0))),
        compiler_params=pltpu.CompilerParams(
            dimension_semantics=("arbitrary",),     # grid-resident accumulator
            vmem_limit_bytes=vmem_limit),
    )(xflat, w2, mask)

    # ---- tiny per-channel BN folding (plain JAX) ----
    count = float(N * H * W)
    mean = tot_sum[:, 0] / count
    # TODO(synk): E[x^2]-E[x]^2 in f32 can cancel when |mean| >> std; clamped at 0.
    var = jnp.maximum(tot_sq[:, 0] / count - mean * mean, 0.0)
    scale = gamma * jax.lax.rsqrt(var + eps)
    shift = beta - mean * scale
    scale2 = scale.reshape(Cout, 1).astype(jnp.float32)
    shift2 = shift.reshape(Cout, 1).astype(jnp.float32)

    # ---- pass 2: conv recomputed + fused scale/shift, lane-dense (Cout, H*Wp) out ----
    # (Recompute vs. store-and-reload: this layer is memory-bound at its channel
    #  counts on v5e/v6e; on v7x with large C, flip to storing the bf16 conv in
    #  pass 1 and making pass 2 a pure elementwise scale/shift.)
    norm_kernel = functools.partial(_conv_norm_kernel, k=K, cp=Cp, wp=Wp, m=m)
    out_flat = pl.pallas_call(
        norm_kernel,
        out_shape=jax.ShapeDtypeStruct((N, Cout, m), jnp.float32),
        grid=(N,),
        in_specs=[x_spec, w_spec,
                  pl.BlockSpec((Cout, 1), lambda n: (0, 0)),
                  pl.BlockSpec((Cout, 1), lambda n: (0, 0))],
        out_specs=pl.BlockSpec((1, Cout, m), lambda n: (n, 0, 0)),
        compiler_params=pltpu.CompilerParams(
            dimension_semantics=("parallel",),      # images shard across TCs (v7x)
            vmem_limit_bytes=vmem_limit),
    )(xflat, w2, scale2, shift2)

    # ---- glue: contiguous reshape (free) + width crop; NO transpose ----
    return out_flat.reshape(N, Cout, H, Wp)[:, :, :, :W]


def reference_forward(x, weight, bias, gamma, beta, eps=1e-5):
    y = jax.lax.conv_general_dilated(
        x, weight, window_strides=(1, 1), padding="SAME",
        dimension_numbers=("NCHW", "OIHW", "NCHW"))
    y = y + bias[None, :, None, None]
    mean = jnp.mean(y, axis=(0, 2, 3), keepdims=True)
    var = jnp.mean((y - mean) ** 2, axis=(0, 2, 3), keepdims=True)
    return (gamma[None, :, None, None] * (y - mean) * jax.lax.rsqrt(var + eps)
            + beta[None, :, None, None])


if __name__ == "__main__":
    key = jax.random.PRNGKey(0)
    k_x, k_w, k_b = jax.random.split(key, 3)

    N, C, H, W, K = 2, 4, 16, 16, 3
    x = jax.random.normal(k_x, (N, C, H, W), jnp.float32)

    # Deterministic parameter init (PyTorch-style uniform bounds for conv;
    # BatchNorm defaults: gamma=1, beta=0).
    fan_in = C * K * K
    bound = 1.0 / (fan_in ** 0.5)
    weight = jax.random.uniform(k_w, (C, C, K, K), jnp.float32, -bound, bound)
    bias = jax.random.uniform(k_b, (C,), jnp.float32, -bound, bound)
    gamma = jnp.ones((C,), jnp.float32)
    beta = jnp.zeros((C,), jnp.float32)

    ref = reference_forward(x, weight, bias, gamma, beta)

    # Strict f32 compute path: bit-close to the f32 reference.
    out_f32 = two_module_forward(x, weight, bias, gamma, beta,
                                 compute_dtype=jnp.float32)
    out_f32 = jax.block_until_ready(out_f32)
    assert out_f32.shape == (N, C, H, W)
    err_f32 = float(jnp.max(jnp.abs(out_f32 - ref)))
    assert err_f32 < 1e-4, err_f32

    # Default path: bf16 inputs/weights, f32 accumulation/epilogue (perf default).
    out_bf16 = two_module_forward(x, weight, bias, gamma, beta)
    out_bf16 = jax.block_until_ready(out_bf16)
    assert out_bf16.shape == (N, C, H, W)
    err_bf16 = float(jnp.max(jnp.abs(out_bf16 - ref)))
    assert err_bf16 < 5e-2, err_bf16

    print("KERNEL_OK")
</pallas_src>

<mosaic_0001>
module attributes {stable_mosaic.version = 11 : i64} {
  func.func @_conv_stats_kernel(%arg0: i32, %arg1: memref<1x8x342xf32, #tpu.memory_space<vmem>>, %arg2: memref<4x72xf32, #tpu.memory_space<vmem>>, %arg3: memref<1x288xf32, #tpu.memory_space<vmem>>, %arg4: memref<4x1xf32, #tpu.memory_space<vmem>>, %arg5: memref<4x1xf32, #tpu.memory_space<vmem>>) attributes {dimension_semantics = [#tpu.dimension_semantics<arbitrary>], iteration_bounds = array<i64: 2>, scalar_prefetch = 0 : i64, scratch_operands = 0 : i64, tpu.core_type = #tpu.core_type<tc>, window_params = [{transform_indices = @transform_0, window_bounds = array<i64: 1, 8, 342>}, {pipeline_mode = #tpu.pipeline_mode<synchronous>, transform_indices = @transform_1, window_bounds = array<i64: 4, 72>}, {pipeline_mode = #tpu.pipeline_mode<synchronous>, transform_indices = @transform_2, window_bounds = array<i64: 1, 288>}, {pipeline_mode = #tpu.pipeline_mode<synchronous>, transform_indices = @transform_3, window_bounds = array<i64: 4, 1>}, {pipeline_mode = #tpu.pipeline_mode<synchronous>, transform_indices = @transform_4, window_bounds = array<i64: 4, 1>}]} {
    %c0_i32 = arith.constant 0 : i32
    %0 = arith.cmpi eq, %arg0, %c0_i32 : i32
    %1 = arith.extui %0 : i1 to i32
    %c0_i32_0 = arith.constant 0 : i32
    %2 = arith.cmpi ne, %1, %c0_i32_0 : i32
    scf.if %2 {
      %cst_33 = arith.constant 0.000000e+00 : f32
      %54 = vector.broadcast %cst_33 : f32 to vector<4x1xf32>
      %c0_34 = arith.constant 0 : index
      %c0_35 = arith.constant 0 : index
      %55 = vector.load %arg4[%c0_34, %c0_35] : memref<4x1xf32, #tpu.memory_space<vmem>>, vector<4x1xf32>
      tpu.vector_store %arg4[%c0_34, %c0_35], %54 {strides = array<i32>} : memref<4x1xf32, #tpu.memory_space<vmem>>, vector<4x1xf32>,
      %cst_36 = arith.constant 0.000000e+00 : f32
      %56 = vector.broadcast %cst_36 : f32 to vector<4x1xf32>
      %c0_37 = arith.constant 0 : index
      %c0_38 = arith.constant 0 : index
      %57 = vector.load %arg5[%c0_37, %c0_38] : memref<4x1xf32, #tpu.memory_space<vmem>>, vector<4x1xf32>
      tpu.vector_store %arg5[%c0_37, %c0_38], %56 {strides = array<i32>} : memref<4x1xf32, #tpu.memory_space<vmem>>, vector<4x1xf32>,
    } else {
    }
    %c0 = arith.constant 0 : index
    %c0_1 = arith.constant 0 : index
    %c0_2 = arith.constant 0 : index
    %3 = vector.load %arg1[%c0, %c0_1, %c0_2] : memref<1x8x342xf32, #tpu.memory_space<vmem>>, vector<1x8x342xf32>
    %4 = vector.shape_cast %3 : vector<1x8x342xf32> to vector<8x342xf32>
    %5 = vector.extract_strided_slice %4 {offsets = [0, 0], sizes = [8, 288], strides = [1, 1]} : vector<8x342xf32> to vector<8x288xf32>
    %c0_3 = arith.constant 0 : index
    %c0_4 = arith.constant 0 : index
    %6 = vector.load %arg2[%c0_3, %c0_4] : memref<4x72xf32, #tpu.memory_space<vmem>>, vector<4x8xf32>
    %cst = arith.constant dense<0.000000e+00> : vector<4x288xf32>
    %7 = tpu.matmul %6, %5, %cst {dimension_numbers = #tpu.dot_dimension_numbers<[1], [0], [0], [1], [0, 0, 1, 1], [], []>} : vector<4x8xf32>, vector<8x288xf32>, vector<4x288xf32> -> vector<4x288xf32>
    %8 = vector.extract_strided_slice %4 {offsets = [0, 1], sizes = [8, 288], strides = [1, 1]} : vector<8x342xf32> to vector<8x288xf32>
    %c0_5 = arith.constant 0 : index
    %c8 = arith.constant 8 : index
    %9 = vector.load %arg2[%c0_5, %c8] : memref<4x72xf32, #tpu.memory_space<vmem>>, vector<4x8xf32>
    %cst_6 = arith.constant dense<0.000000e+00> : vector<4x288xf32>
    %10 = tpu.matmul %9, %8, %cst_6 {dimension_numbers = #tpu.dot_dimension_numbers<[1], [0], [0], [1], [0, 0, 1, 1], [], []>} : vector<4x8xf32>, vector<8x288xf32>, vector<4x288xf32> -> vector<4x288xf32>
    %11 = arith.addf %7, %10 : vector<4x288xf32>
    %12 = vector.extract_strided_slice %4 {offsets = [0, 2], sizes = [8, 288], strides = [1, 1]} : vector<8x342xf32> to vector<8x288xf32>
    %c0_7 = arith.constant 0 : index
    %c16 = arith.constant 16 : index
    %13 = vector.load %arg2[%c0_7, %c16] : memref<4x72xf32, #tpu.memory_space<vmem>>, vector<4x8xf32>
    %cst_8 = arith.constant dense<0.000000e+00> : vector<4x288xf32>
    %14 = tpu.matmul %13, %12, %cst_8 {dimension_numbers = #tpu.dot_dimension_numbers<[1], [0], [0], [1], [0, 0, 1, 1], [], []>} : vector<4x8xf32>, vector<8x288xf32>, vector<4x288xf32> -> vector<4x288xf32>
    %15 = arith.addf %11, %14 : vector<4x288xf32>
    %16 = vector.extract_strided_slice %4 {offsets = [0, 18], sizes = [8, 288], strides = [1, 1]} : vector<8x342xf32> to vector<8x288xf32>
    %c0_9 = arith.constant 0 : index
    %c24 = arith.constant 24 : index
    %17 = vector.load %arg2[%c0_9, %c24] : memref<4x72xf32, #tpu.memory_space<vmem>>, vector<4x8xf32>
    %cst_10 = arith.constant dense<0.000000e+00> : vector<4x288xf32>
    %18 = tpu.matmul %17, %16, %cst_10 {dimension_numbers = #tpu.dot_dimension_numbers<[1], [0], [0], [1], [0, 0, 1, 1], [], []>} : vector<4x8xf32>, vector<8x288xf32>, vector<4x288xf32> -> vector<4x288xf32>
    %19 = arith.addf %15, %18 : vector<4x288xf32>
    %20 = vector.extract_strided_slice %4 {offsets = [0, 19], sizes = [8, 288], strides = [1, 1]} : vector<8x342xf32> to vector<8x288xf32>
    %c0_11 = arith.constant 0 : index
    %c32 = arith.constant 32 : index
    %21 = vector.load %arg2[%c0_11, %c32] : memref<4x72xf32, #tpu.memory_space<vmem>>, vector<4x8xf32>
    %cst_12 = arith.constant dense<0.000000e+00> : vector<4x288xf32>
    %22 = tpu.matmul %21, %20, %cst_12 {dimension_numbers = #tpu.dot_dimension_numbers<[1], [0], [0], [1], [0, 0, 1, 1], [], []>} : vector<4x8xf32>, vector<8x288xf32>, vector<4x288xf32> -> vector<4x288xf32>
    %23 = arith.addf %19, %22 : vector<4x288xf32>
    %24 = vector.extract_strided_slice %4 {offsets = [0, 20], sizes = [8, 288], strides = [1, 1]} : vector<8x342xf32> to vector<8x288xf32>
    %c0_13 = arith.constant 0 : index
    %c40 = arith.constant 40 : index
    %25 = vector.load %arg2[%c0_13, %c40] : memref<4x72xf32, #tpu.memory_space<vmem>>, vector<4x8xf32>
    %cst_14 = arith.constant dense<0.000000e+00> : vector<4x288xf32>
    %26 = tpu.matmul %25, %24, %cst_14 {dimension_numbers = #tpu.dot_dimension_numbers<[1], [0], [0], [1], [0, 0, 1, 1], [], []>} : vector<4x8xf32>, vector<8x288xf32>, vector<4x288xf32> -> vector<4x288xf32>
    %27 = arith.addf %23, %26 : vector<4x288xf32>
    %28 = vector.extract_strided_slice %4 {offsets = [0, 36], sizes = [8, 288], strides = [1, 1]} : vector<8x342xf32> to vector<8x288xf32>
    %c0_15 = arith.constant 0 : index
    %c48 = arith.constant 48 : index
    %29 = vector.load %arg2[%c0_15, %c48] : memref<4x72xf32, #tpu.memory_space<vmem>>, vector<4x8xf32>
    %cst_16 = arith.constant dense<0.000000e+00> : vector<4x288xf32>
    %30 = tpu.matmul %29, %28, %cst_16 {dimension_numbers = #tpu.dot_dimension_numbers<[1], [0], [0], [1], [0, 0, 1, 1], [], []>} : vector<4x8xf32>, vector<8x288xf32>, vector<4x288xf32> -> vector<4x288xf32>
    %31 = arith.addf %27, %30 : vector<4x288xf32>
    %32 = vector.extract_strided_slice %4 {offsets = [0, 37], sizes = [8, 288], strides = [1, 1]} : vector<8x342xf32> to vector<8x288xf32>
    %c0_17 = arith.constant 0 : index
    %c56 = arith.constant 56 : index
    %33 = vector.load %arg2[%c0_17, %c56] : memref<4x72xf32, #tpu.memory_space<vmem>>, vector<4x8xf32>
    %cst_18 = arith.constant dense<0.000000e+00> : vector<4x288xf32>
    %34 = tpu.matmul %33, %32, %cst_18 {dimension_numbers = #tpu.dot_dimension_numbers<[1], [0], [0], [1], [0, 0, 1, 1], [], []>} : vector<4x8xf32>, vector<8x288xf32>, vector<4x288xf32> -> vector<4x288xf32>
    %35 = arith.addf %31, %34 : vector<4x288xf32>
    %36 = vector.extract_strided_slice %4 {offsets = [0, 38], sizes = [8, 288], strides = [1, 1]} : vector<8x342xf32> to vector<8x288xf32>
    %c0_19 = arith.constant 0 : index
    %c64 = arith.constant 64 : index
    %37 = vector.load %arg2[%c0_19, %c64] : memref<4x72xf32, #tpu.memory_space<vmem>>, vector<4x8xf32>
    %cst_20 = arith.constant dense<0.000000e+00> : vector<4x288xf32>
    %38 = tpu.matmul %37, %36, %cst_20 {dimension_numbers = #tpu.dot_dimension_numbers<[1], [0], [0], [1], [0, 0, 1, 1], [], []>} : vector<4x8xf32>, vector<8x288xf32>, vector<4x288xf32> -> vector<4x288xf32>
    %39 = arith.addf %35, %38 : vector<4x288xf32>
    %c0_21 = arith.constant 0 : index
    %c0_22 = arith.constant 0 : index
    %40 = vector.load %arg3[%c0_21, %c0_22] : memref<1x288xf32, #tpu.memory_space<vmem>>, vector<1x288xf32>
    %41 = vector.broadcast %40 : vector<1x288xf32> to vector<4x288xf32>
    %42 = arith.mulf %39, %41 : vector<4x288xf32>
    %c0_23 = arith.constant 0 : index
    %c0_24 = arith.constant 0 : index
    %43 = vector.load %arg4[%c0_23, %c0_24] : memref<4x1xf32, #tpu.memory_space<vmem>>, vector<4x1xf32>
    %cst_25 = arith.constant dense<0.000000e+00> : vector<4xf32>
    %44 = vector.multi_reduction <add>, %42, %cst_25 [1] : vector<4x288xf32> to vector<4xf32>
    %45 = vector.shape_cast %44 : vector<4xf32> to vector<4x1xf32>
    %46 = arith.addf %43, %45 : vector<4x1xf32>
    %c0_26 = arith.constant 0 : index
    %c0_27 = arith.constant 0 : index
    %47 = vector.load %arg4[%c0_26, %c0_27] : memref<4x1xf32, #tpu.memory_space<vmem>>, vector<4x1xf32>
    tpu.vector_store %arg4[%c0_26, %c0_27], %46 {strides = array<i32>} : memref<4x1xf32, #tpu.memory_space<vmem>>, vector<4x1xf32>,
    %c0_28 = arith.constant 0 : index
    %c0_29 = arith.constant 0 : index
    %48 = vector.load %arg5[%c0_28, %c0_29] : memref<4x1xf32, #tpu.memory_space<vmem>>, vector<4x1xf32>
    %49 = arith.mulf %42, %42 : vector<4x288xf32>
    %cst_30 = arith.constant dense<0.000000e+00> : vector<4xf32>
    %50 = vector.multi_reduction <add>, %49, %cst_30 [1] : vector<4x288xf32> to vector<4xf32>
    %51 = vector.shape_cast %50 : vector<4xf32> to vector<4x1xf32>
    %52 = arith.addf %48, %51 : vector<4x1xf32>
    %c0_31 = arith.constant 0 : index
    %c0_32 = arith.constant 0 : index
    %53 = vector.load %arg5[%c0_31, %c0_32] : memref<4x1xf32, #tpu.memory_space<vmem>>, vector<4x1xf32>
    tpu.vector_store %arg5[%c0_31, %c0_32], %52 {strides = array<i32>} : memref<4x1xf32, #tpu.memory_space<vmem>>, vector<4x1xf32>,
    return
  }
  func.func @transform_0(%arg0: i32) -> (i32, i32, i32) {
    %c0_i32 = arith.constant 0 : i32
    %c0_i32_0 = arith.constant 0 : i32
    %c0_i32_1 = arith.constant 0 : i32
    return %arg0, %c0_i32, %c0_i32_0 : i32, i32, i32
  }
  func.func @transform_1(%arg0: i32) -> (i32, i32) {
    %c0_i32 = arith.constant 0 : i32
    %c0_i32_0 = arith.constant 0 : i32
    %c0_i32_1 = arith.constant 0 : i32
    return %c0_i32, %c0_i32_0 : i32, i32
  }
  func.func @transform_2(%arg0: i32) -> (i32, i32) {
    %c0_i32 = arith.constant 0 : i32
    %c0_i32_0 = arith.constant 0 : i32
    %c0_i32_1 = arith.constant 0 : i32
    return %c0_i32, %c0_i32_0 : i32, i32
  }
  func.func @transform_3(%arg0: i32) -> (i32, i32) {
    %c0_i32 = arith.constant 0 : i32
    %c0_i32_0 = arith.constant 0 : i32
    %c0_i32_1 = arith.constant 0 : i32
    return %c0_i32, %c0_i32_0 : i32, i32
  }
  func.func @transform_4(%arg0: i32) -> (i32, i32) {
    %c0_i32 = arith.constant 0 : i32
    %c0_i32_0 = arith.constant 0 : i32
    %c0_i32_1 = arith.constant 0 : i32
    return %c0_i32, %c0_i32_0 : i32, i32
  }
}

</mosaic_0001>

<llo_original>
// kernel: tpu_custom_call.1
$region0: #{tpu_custom_call.1}
  #allocation0 [shape = 'u32[]', space=smem, size = 0x4, offset = 0x4, fixed_abs, tag = 'smem constant byte address 0x4 - core index']
  #allocation1 [shape = 'u32[144,128]{1,0:T(1,128)}', space=vmem, size = 0x12000, scoped, tag = 'internal scratch']
  %s0 = inlined_call_operand.hbm [shape: f32[2,8,342], index: 0, kind: input, shape index: {}]
  %s1 = inlined_call_operand.hbm [shape: f32[4,72], index: 1, kind: input, shape index: {}]
  %s2 = inlined_call_operand.vmem [shape: f32[1,288], index: 2, kind: input, shape index: {}]
  %s3 = inlined_call_operand.vmem [shape: f32[4,1], index: 3, kind: output, shape index: {0}]
  %s4 = inlined_call_operand.vmem [shape: f32[4,1], index: 4, kind: output, shape index: {1}]
  %5 = xla_tuple %s3, %s4
  %s6 = sld [smem:[#allocation0]]
  $region65: #{tpu_custom_call.1} parent=0
    _
  %s8 = ssub.s32 1, %s6
  %s9 = scalar_select 0, %s8, %s6
  $region1: #{tpu_custom_call.1} parent=0
    #allocation2 [shape = 'u8[24576]{0}', space=vmem, size = 0x6000, scoped, tag = 'input window, operand 0']
    #allocation3 [shape = 's32[2]{0}', space=sflag, size = 0x8, scoped, tag = 'scoped memory for tpu_custom_call.1']
    #allocation4 [shape = 'u8[2048]{0}', space=vmem, size = 0x800, scoped, tag = 'input window, operand 1, single buffered']
    #allocation5 [shape = 's32[1]{0}', space=sflag, size = 0x4, scoped, tag = 'scoped memory for tpu_custom_call.1']
    %10 = vsyncpa [#allocation3], 0
    %s11 = scalar_lea.sflag [#allocation3], 1
    %12 = vsyncpa %s11, 0
    %13 = vsyncpa [#allocation5], 0
    loop: start=0, step=1, limit=4
    $region2: #{tpu_custom_call.1} parent=1 // loop_pre_header
      _
    $region3: #{tpu_custom_call.1} parent=1 // loop_header
      %s15 = sphi 0, %s19
      %p16 = scmp.ge.s32.totalorder %s15, 4
      %s25 = sphi 0, %s27
      %s28 = sphi 0, %s25
      %s29 = sphi 0, %s28
      %s45 = sphi 0, %s29
      %s49 = sphi 0, %s49
      %s51 = sphi 0, %s49
      %s52 = sphi 0, %s51
      %s66 = sphi 0, %s52
      %s70 = sphi 0, %s70
      %s72 = sphi 0, %s70
      %s73 = sphi 0, %s72
      %s87 = sphi 0, %s73
      %s91 = sphi 0, %s91
      %s93 = sphi 0, %s91
      %s94 = sphi 0, %s93
      %s108 = sphi 0, %s94
      %s112 = sphi 0, %s112
      %s114 = sphi 0, %s112
      %s115 = sphi 0, %s114
      %s129 = sphi 0, %s115
    $region4: #{tpu_custom_call.1} parent=1 // loop_header_branch
      %18 = sbr.rel (%p16) target = $region8
    $region5: #{tpu_custom_call.1} parent=1 // loop_body
      %s20 = ssub.s32 %s15, 1
      %s21 = ssub.s32 %s15, 2
      %s22 = sadd.s32 %s15, 1
      %s23 = ssub.s32 %s15, %s22
      %p24 = scmp.eq.s32.totalorder %s23, 0
      %s26 = sadd.s32 %s25, 1
      %s27 = scalar_select %p24, %s25, %s26
      %p30 = pneg %p24
      %p31 = scmp.eq.s32.totalorder %s15, 1
      %p32 = por %p30, %p31
      %p33 = scmp.ne.s32.totalorder %s25, %s28
      %p34 = scmp.eq.s32.totalorder %s15, 0
      %p35 = por %p33, %p34
      %p36 = scmp.ne.s32.totalorder %s25, %s28
      %p37 = scmp.eq.s32.totalorder %s20, 1
      %p38 = por %p36, %p37
      %p39 = scmp.ne.s32.totalorder %s28, %s29
      %p40 = scmp.eq.s32.totalorder %s20, 0
      %p41 = por %p39, %p40
      %p42 = scmp.ne.s32.totalorder %s28, %s29
      %p43 = scmp.eq.s32.totalorder %s21, 1
      %p44 = por %p42, %p43
      %p46 = scmp.ne.s32.totalorder %s29, %s45
      %p47 = scmp.eq.s32.totalorder %s21, 0
      %p48 = por %p46, %p47
      %s50 = sadd.s32 %s49, 1
      %p53 = scmp.eq.s32.totalorder %s15, 1
      %p54 = scmp.ne.s32.totalorder %s49, %s51
      %p55 = scmp.eq.s32.totalorder %s15, 0
      %p56 = por %p54, %p55
      %p57 = scmp.ne.s32.totalorder %s49, %s51
      %p58 = scmp.eq.s32.totalorder %s20, 1
      %p59 = por %p57, %p58
      %p60 = scmp.ne.s32.totalorder %s51, %s52
      %p61 = scmp.eq.s32.totalorder %s20, 0
      %p62 = por %p60, %p61
      %p63 = scmp.ne.s32.totalorder %s51, %s52
      %p64 = scmp.eq.s32.totalorder %s21, 1
      %p65 = por %p63, %p64
      %p67 = scmp.ne.s32.totalorder %s52, %s66
      %p68 = scmp.eq.s32.totalorder %s21, 0
      %p69 = por %p67, %p68
      %s71 = sadd.s32 %s70, 1
      %p74 = scmp.eq.s32.totalorder %s15, 1
      %p75 = scmp.ne.s32.totalorder %s70, %s72
      %p76 = scmp.eq.s32.totalorder %s15, 0
      %p77 = por %p75, %p76
      %p78 = scmp.ne.s32.totalorder %s70, %s72
      %p79 = scmp.eq.s32.totalorder %s20, 1
      %p80 = por %p78, %p79
      %p81 = scmp.ne.s32.totalorder %s72, %s73
      %p82 = scmp.eq.s32.totalorder %s20, 0
      %p83 = por %p81, %p82
      %p84 = scmp.ne.s32.totalorder %s72, %s73
      %p85 = scmp.eq.s32.totalorder %s21, 1
      %p86 = por %p84, %p85
      %p88 = scmp.ne.s32.totalorder %s73, %s87
      %p89 = scmp.eq.s32.totalorder %s21, 0
      %p90 = por %p88, %p89
      %s92 = sadd.s32 %s91, 1
      %p95 = scmp.eq.s32.totalorder %s15, 1
      %p96 = scmp.ne.s32.totalorder %s91, %s93
      %p97 = scmp.eq.s32.totalorder %s15, 0
      %p98 = por %p96, %p97
      %p99 = scmp.ne.s32.totalorder %s91, %s93
      %p100 = scmp.eq.s32.totalorder %s20, 1
      %p101 = por %p99, %p100
      %p102 = scmp.ne.s32.totalorder %s93, %s94
      %p103 = scmp.eq.s32.totalorder %s20, 0
      %p104 = por %p102, %p103
      %p105 = scmp.ne.s32.totalorder %s93, %s94
      %p106 = scmp.eq.s32.totalorder %s21, 1
      %p107 = por %p105, %p106
      %p109 = scmp.ne.s32.totalorder %s94, %s108
      %p110 = scmp.eq.s32.totalorder %s21, 0
      %p111 = por %p109, %p110
      %s113 = sadd.s32 %s112, 1
      %p116 = scmp.eq.s32.totalorder %s15, 1
      %p117 = scmp.ne.s32.totalorder %s112, %s114
      %p118 = scmp.eq.s32.totalorder %s15, 0
      %p119 = por %p117, %p118
      %p120 = scmp.ne.s32.totalorder %s112, %s114
      %p121 = scmp.eq.s32.totalorder %s20, 1
      %p122 = por %p120, %p121
      %p123 = scmp.ne.s32.totalorder %s114, %s115
      %p124 = scmp.eq.s32.totalorder %s20, 0
      %p125 = por %p123, %p124
      %p126 = scmp.ne.s32.totalorder %s114, %s115
      %p127 = scmp.eq.s32.totalorder %s21, 1
      %p128 = por %p126, %p127
      %p130 = scmp.ne.s32.totalorder %s115, %s129
      %p131 = scmp.eq.s32.totalorder %s21, 0
      %p132 = por %p130, %p131
      %p133 = scmp.le.s32.totalorder 1, %s15
      %p134 = scmp.lt.s32.totalorder %s15, 3
      %p135 = pnand %p133, %p134
      %p136 = pneg %p135
      // Predicated region
      $region9: #{tpu_custom_call.1} parent=5 // pred_check
        _
      $region10: #{tpu_custom_call.1} parent=5 // pred_check_branch
        %138 = sbr.rel (%p135) target = $region12
      $region11: #{tpu_custom_call.1} parent=5 // pred_region
        %s139 = ssub.s32 %s15, 1
        // Predicated region
        $region13: #{tpu_custom_call.1} parent=11 // pred_check
          %p140 = pneg %p62
        $region14: #{tpu_custom_call.1} parent=11 // pred_check_branch
          %142 = sbr.rel (%p140) target = $region16
        $region15: #{tpu_custom_call.1} parent=11 // pred_region
          %s144 = ssub.s32 64, 64
          %145 = vsyncadd [#allocation5], %s144
          %s147 = sshll.u32 [#allocation4], 4
          %s148 = int_to_ptr.vmem [resolvable:$true] %s147
          %150 = dma.hbm_to_vmem [thread:$0]  %s1, 64, %s148, [#allocation5]
        $region16: #{tpu_custom_call.1} parent=11 // pred_fallthru
          _
        // Predicated region
        $region17: #{tpu_custom_call.1} parent=11 // pred_check
          %p151 = pneg %p83
        $region18: #{tpu_custom_call.1} parent=11 // pred_check_branch
          %153 = sbr.rel (%p151) target = $region20
        $region19: #{tpu_custom_call.1} parent=11 // pred_region
          _
        $region20: #{tpu_custom_call.1} parent=11 // pred_fallthru
          _
      $region12: #{tpu_custom_call.1} parent=5 // pred_fallthru
        _
      %p154 = scmp.lt.s32.totalorder %s15, 2
      // Predicated region
      $region21: #{tpu_custom_call.1} parent=5 // pred_check
        %p155 = pneg %p154
      $region22: #{tpu_custom_call.1} parent=5 // pred_check_branch
        %157 = sbr.rel (%p155) target = $region24
      $region23: #{tpu_custom_call.1} parent=5 // pred_region
        // Predicated region
        $region25: #{tpu_custom_call.1} parent=23 // pred_check
          %p158 = pneg %p35
        $region26: #{tpu_custom_call.1} parent=23 // pred_check_branch
          %160 = sbr.rel (%p158) target = $region28
        $region27: #{tpu_custom_call.1} parent=23 // pred_region
          %s161 = sand.u32 %s25, 1
          %s162 = scalar_lea.sflag [#allocation3], %s161
          %s163 = sand.u32 %s25, 1
          %s164 = smul.addr %s163, 24
          %s165 = scalar_lea.vmem [#allocation2], %s164
          %s167 = ssub.s32 384, 384
          %168 = vsyncadd %s162, %s167
          %s169 = smul.addr %s15, 3
          %s170 = smul.addr %s169, 128
          %s171 = scalar_lea.hbm %s0, %s170
          %s173 = sshll.u32 %s165, 4
          %s174 = int_to_ptr.vmem [resolvable:$true] %s173
          %176 = dma.hbm_to_vmem [thread:$0]  %s171, 384, %s174, %s162
        $region28: #{tpu_custom_call.1} parent=23 // pred_fallthru
          _
      $region24: #{tpu_custom_call.1} parent=5 // pred_fallthru
        _
      %p177 = scmp.le.s32.totalorder 1, %s15
      %p178 = scmp.lt.s32.totalorder %s15, 3
      %p179 = pnand %p177, %p178
      %p180 = pneg %p179
      // Predicated region
      $region29: #{tpu_custom_call.1} parent=5 // pred_check
        _
      $region30: #{tpu_custom_call.1} parent=5 // pred_check_branch
        %182 = sbr.rel (%p179) target = $region32
      $region31: #{tpu_custom_call.1} parent=5 // pred_region
        %s183 = ssub.s32 %s15, 1
        %s184 = sand.u32 %s28, 1
        %s185 = scalar_lea.sflag [#allocation3], %s184
        %s186 = sand.u32 %s28, 1
        %s187 = smul.addr %s186, 24
        %s188 = scalar_lea.vmem [#allocation2], %s187
        // Predicated region
        $region33: #{tpu_custom_call.1} parent=31 // pred_check
          %p189 = pneg %p41
        $region34: #{tpu_custom_call.1} parent=31 // pred_check_branch
          %191 = sbr.rel (%p189) target = $region36
        $region35: #{tpu_custom_call.1} parent=31 // pred_region
          %192 = dma.done %s185, 384
        $region36: #{tpu_custom_call.1} parent=31 // pred_fallthru
          _
        // Predicated region
        $region37: #{tpu_custom_call.1} parent=31 // pred_check
          %p193 = pneg %p62
        $region38: #{tpu_custom_call.1} parent=31 // pred_check_branch
          %195 = sbr.rel (%p193) target = $region40
        $region39: #{tpu_custom_call.1} parent=31 // pred_region
          %196 = dma.done [#allocation5], 64
        $region40: #{tpu_custom_call.1} parent=31 // pred_fallthru
          _
        %s197 = sand.u32 %s28, 1
        %s198 = scalar_lea.sflag [#allocation3], %s197
        %s199 = sand.u32 %s28, 1
        %s200 = smul.addr %s199, 24
        %s201 = scalar_lea.vmem [#allocation2], %s200
        %p202 = pneg %p41
        %p203 = pneg %p38
        %p204 = pneg %p62
        %p205 = pneg %p59
        %p206 = pneg %p83
        %p207 = pneg %p80
        %p208 = pneg %p104
        %p209 = pneg %p101
        %p210 = pneg %p125
        %p211 = pneg %p122
        %p212 = scmp.eq.s32.totalorder %s20, 0
        // Predicated region
        $region41: #{tpu_custom_call.1} parent=31 // pred_check
          %p213 = pneg %p212
        $region42: #{tpu_custom_call.1} parent=31 // pred_check_branch
          %215 = sbr.rel (%p213) target = $region44
        $region43: #{tpu_custom_call.1} parent=31 // pred_region
          %vm216 = vcmask 3072
          %217 = vst.msk [vmem:[%s3] sm:$0xf] %vm216, 0.0
          %218 = vst.msk [vmem:[%s4] sm:$0xf] %vm216, 0.0
        $region44: #{tpu_custom_call.1} parent=31 // pred_fallthru
          _
        %v219 = vld [vmem:[%s188] sm:$0xff]
        %v220 = vld [vmem:[%s188 + $0x8] sm:$0xff]
        %v221 = vld [vmem:[%s188 + $0x10] sm:$0xff]
        %v222 = vld [vmem:[#allocation4] sm:$0xf]
        %224 = vrot.lane.b32.xlu0 %v222, 120
        %v225 = vpop.permute.xlu0 %224
        %229 = vrot.lane.b32.xlu0 %v219, 127
        %v230 = vpop.permute.xlu0 %229
        %231 = vrot.lane.b32.xlu0 %v220, 127
        %v232 = vpop.permute.xlu0 %231
        %233 = vrot.lane.b32.xlu0 %v221, 127
        %v234 = vpop.permute.xlu0 %233
        %vm235 = vcmask 1039360
        %v236 = vsel %vm235, %v230, %v232
        %v237 = vsel %vm235, %v232, %v234
        %vm241 = vcmask 64512
        %v242 = vsel %vm241, %v225, 0
        %244 = vmatprep.subr.mxu0 0.0
        %245 = vmatpush1.msra.mxu0 0.0
        %246 = vmatprep.subr.mxu0 0.0
        %247 = vmatpush1.msra.mxu0 0.0
        %248 = vmatprep.subr.mxu0 0.0
        %249 = vmatpush1.msra.mxu0 0.0
        %250 = vmatprep.subr.mxu0 0.0
        %251 = vmatpush1.msra.mxu0 0.0
        %252 = vmatprep.subr.mxu0 0.0
        %253 = vmatpush1.msra.mxu0 0.0
        %254 = vmatprep.subr.mxu0 0.0
        %255 = vmatpush1.msra.mxu0 0.0
        %256 = vmatprep.subr.mxu0 0.0
        %257 = vmatpush1.msra.mxu0 0.0
        %258 = vmatprep.subr.mxu0 0.0
        %259 = vmatpush1.msra.mxu0 0.0
        %260 = vmatprep.subr.mxu0 0.0
        %261 = vmatpush1.msra.mxu0 0.0
        %262 = vmatprep.subr.mxu0 0.0
        %263 = vmatpush1.msra.mxu0 0.0
        %264 = vmatprep.subr.mxu0 0.0
        %265 = vmatpush1.msra.mxu0 0.0
        %266 = vmatprep.subr.mxu0 0.0
        %267 = vmatpush1.msra.mxu0 0.0
        %268 = vmatprep.subr.mxu0 0.0
        %269 = vmatpush1.msra.mxu0 0.0
        %270 = vmatprep.subr.mxu0 0.0
        %271 = vmatpush1.msra.mxu0 0.0
        %272 = vmatprep.subr.mxu0 0.0
        %273 = vmatpush1.msra.mxu0 0.0
        %274 = vmatprep.subr.mxu0 %v237
        %275 = vmatpush1.msra.mxu0 %v236
        %276 = vmatprep.subr.mxu0 0.0
        %277 = vmatpush2.msra.mxu0 0.0
        %278 = vmatprep.subr.mxu0 0.0
        %279 = vmatpush2.msra.mxu0 0.0
        %280 = vmatprep.subr.mxu0 0.0
        %281 = vmatpush2.msra.mxu0 0.0
        %282 = vmatprep.subr.mxu0 0.0
        %283 = vmatpush2.msra.mxu0 0.0
        %284 = vmatprep.subr.mxu0 0.0
        %285 = vmatpush2.msra.mxu0 0.0
        %286 = vmatprep.subr.mxu0 0.0
        %287 = vmatpush2.msra.mxu0 0.0
        %288 = vmatprep.subr.mxu0 0.0
        %289 = vmatpush2.msra.mxu0 0.0
        %290 = vmatprep.subr.mxu0 0.0
        %291 = vmatpush2.msra.mxu0 0.0
        %292 = vmatprep.subr.mxu0 0.0
        %293 = vmatpush2.msra.mxu0 0.0
        %294 = vmatprep.subr.mxu0 0.0
        %295 = vmatpush2.msra.mxu0 0.0
        %296 = vmatprep.subr.mxu0 0.0
        %297 = vmatpush2.msra.mxu0 0.0
        %298 = vmatprep.subr.mxu0 0.0
        %299 = vmatpush2.msra.mxu0 0.0
        %300 = vmatprep.subr.mxu0 0.0
        %301 = vmatpush2.msra.mxu0 0.0
        %302 = vmatprep.subr.mxu0 0.0
        %303 = vmatpush2.msra.mxu0 0.0
        %304 = vmatprep.subr.mxu0 0.0
        %305 = vmatpush2.msra.mxu0 0.0
        %306 = vmatprep.subr.mxu0 0.0
        %307 = vmatpush2.msra.mxu0 0.0
        %308 = vmatprep.mubr.f32.mxu0 0.0
        %309 = vmatmul.mubr.f32.gmra.mxu0 %v242
        %v310 = vpop.f32.mrf.mxu0
        %v311 = vadd.f32 0.0, %v310
        %v312 = vpop.f32.mrf.mxu0
        %v313 = vadd.f32 0.0, %v312
        %314 = vdwg.mxu0
        %315 = vmatprep.subr.mxu0 0.0
        %316 = vmatpush1.msra.mxu0 0.0
        %317 = vmatprep.subr.mxu0 0.0
        %318 = vmatpush1.msra.mxu0 0.0
        %319 = vmatprep.subr.mxu0 0.0
        %320 = vmatpush1.msra.mxu0 0.0
        %321 = vmatprep.subr.mxu0 0.0
        %322 = vmatpush1.msra.mxu0 0.0
        %323 = vmatprep.subr.mxu0 0.0
        %324 = vmatpush1.msra.mxu0 0.0
        %325 = vmatprep.subr.mxu0 0.0
        %326 = vmatpush1.msra.mxu0 0.0
        %327 = vmatprep.subr.mxu0 0.0
        %328 = vmatpush1.msra.mxu0 0.0
        %329 = vmatprep.subr.mxu0 0.0
        %330 = vmatpush1.msra.mxu0 0.0
        %331 = vmatprep.subr.mxu0 0.0
        %332 = vmatpush1.msra.mxu0 0.0
        %333 = vmatprep.subr.mxu0 0.0
        %334 = vmatpush1.msra.mxu0 0.0
        %335 = vmatprep.subr.mxu0 0.0
        %336 = vmatpush1.msra.mxu0 0.0
        %337 = vmatprep.subr.mxu0 0.0
        %338 = vmatpush1.msra.mxu0 0.0
        %339 = vmatprep.subr.mxu0 0.0
        %340 = vmatpush1.msra.mxu0 0.0
        %341 = vmatprep.subr.mxu0 0.0
        %342 = vmatpush1.msra.mxu0 0.0
        %343 = vmatprep.subr.mxu0 0.0
        %344 = vmatpush1.msra.mxu0 0.0
        %345 = vmatprep.subr.mxu0 0.0
        %346 = vmatpush1.msra.mxu0 %v234
        %347 = vmatprep.subr.mxu0 0.0
        %348 = vmatpush2.msra.mxu0 0.0
        %349 = vmatprep.subr.mxu0 0.0
        %350 = vmatpush2.msra.mxu0 0.0
        %351 = vmatprep.subr.mxu0 0.0
        %352 = vmatpush2.msra.mxu0 0.0
        %353 = vmatprep.subr.mxu0 0.0
        %354 = vmatpush2.msra.mxu0 0.0
        %355 = vmatprep.subr.mxu0 0.0
        %356 = vmatpush2.msra.mxu0 0.0
        %357 = vmatprep.subr.mxu0 0.0
        %358 = vmatpush2.msra.mxu0 0.0
        %359 = vmatprep.subr.mxu0 0.0
        %360 = vmatpush2.msra.mxu0 0.0
        %361 = vmatprep.subr.mxu0 0.0
        %362 = vmatpush2.msra.mxu0 0.0
        %363 = vmatprep.subr.mxu0 0.0
        %364 = vmatpush2.msra.mxu0 0.0
        %365 = vmatprep.subr.mxu0 0.0
        %366 = vmatpush2.msra.mxu0 0.0
        %367 = vmatprep.subr.mxu0 0.0
        %368 = vmatpush2.msra.mxu0 0.0
        %369 = vmatprep.subr.mxu0 0.0
        %370 = vmatpush2.msra.mxu0 0.0
        %371 = vmatprep.subr.mxu0 0.0
        %372 = vmatpush2.msra.mxu0 0.0
        %373 = vmatprep.subr.mxu0 0.0
        %374 = vmatpush2.msra.mxu0 0.0
        %375 = vmatprep.subr.mxu0 0.0
        %376 = vmatpush2.msra.mxu0 0.0
        %377 = vmatprep.subr.mxu0 0.0
        %378 = vmatpush2.msra.mxu0 0.0
        %379 = vmatprep.mubr.f32.mxu0 0.0
        %380 = vmatmul.mubr.f32.gmra.mxu0 %v242
        %v381 = vpop.f32.mrf.mxu0
        %v382 = vadd.f32 0.0, %v381
        %v383 = vpop.f32.mrf.mxu0
        %384 = vdwg.mxu0
        %v385 = vsel %vm241, %v222, 0
        %387 = vmatprep.subr.mxu0 0.0
        %388 = vmatpush1.msra.mxu0 0.0
        %389 = vmatprep.subr.mxu0 0.0
        %390 = vmatpush1.msra.mxu0 0.0
        %391 = vmatprep.subr.mxu0 0.0
        %392 = vmatpush1.msra.mxu0 0.0
        %393 = vmatprep.subr.mxu0 0.0
        %394 = vmatpush1.msra.mxu0 0.0
        %395 = vmatprep.subr.mxu0 0.0
        %396 = vmatpush1.msra.mxu0 0.0
        %397 = vmatprep.subr.mxu0 0.0
        %398 = vmatpush1.msra.mxu0 0.0
        %399 = vmatprep.subr.mxu0 0.0
        %400 = vmatpush1.msra.mxu0 0.0
        %401 = vmatprep.subr.mxu0 0.0
        %402 = vmatpush1.msra.mxu0 0.0
        %403 = vmatprep.subr.mxu0 0.0
        %404 = vmatpush1.msra.mxu0 0.0
        %405 = vmatprep.subr.mxu0 0.0
        %406 = vmatpush1.msra.mxu0 0.0
        %407 = vmatprep.subr.mxu0 0.0
        %408 = vmatpush1.msra.mxu0 0.0
        %409 = vmatprep.subr.mxu0 0.0
        %410 = vmatpush1.msra.mxu0 0.0
        %411 = vmatprep.subr.mxu0 0.0
        %412 = vmatpush1.msra.mxu0 0.0
        %413 = vmatprep.subr.mxu0 0.0
        %414 = vmatpush1.msra.mxu0 0.0
        %415 = vmatprep.subr.mxu0 0.0
        %416 = vmatpush1.msra.mxu0 0.0
        %417 = vmatprep.subr.mxu0 %v220
        %418 = vmatpush1.msra.mxu0 %v219
        %419 = vmatprep.subr.mxu0 0.0
        %420 = vmatpush2.msra.mxu0 0.0
        %421 = vmatprep.subr.mxu0 0.0
        %422 = vmatpush2.msra.mxu0 0.0
        %423 = vmatprep.subr.mxu0 0.0
        %424 = vmatpush2.msra.mxu0 0.0
        %425 = vmatprep.subr.mxu0 0.0
        %426 = vmatpush2.msra.mxu0 0.0
        %427 = vmatprep.subr.mxu0 0.0
        %428 = vmatpush2.msra.mxu0 0.0
        %429 = vmatprep.subr.mxu0 0.0
        %430 = vmatpush2.msra.mxu0 0.0
        %431 = vmatprep.subr.mxu0 0.0
        %432 = vmatpush2.msra.mxu0 0.0
        %433 = vmatprep.subr.mxu0 0.0
        %434 = vmatpush2.msra.mxu0 0.0
        %435 = vmatprep.subr.mxu0 0.0
        %436 = vmatpush2.msra.mxu0 0.0
        %437 = vmatprep.subr.mxu0 0.0
        %438 = vmatpush2.msra.mxu0 0.0
        %439 = vmatprep.subr.mxu0 0.0
        %440 = vmatpush2.msra.mxu0 0.0
        %441 = vmatprep.subr.mxu0 0.0
        %442 = vmatpush2.msra.mxu0 0.0
        %443 = vmatprep.subr.mxu0 0.0
        %444 = vmatpush2.msra.mxu0 0.0
        %445 = vmatprep.subr.mxu0 0.0
        %446 = vmatpush2.msra.mxu0 0.0
        %447 = vmatprep.subr.mxu0 0.0
        %448 = vmatpush2.msra.mxu0 0.0
        %449 = vmatprep.subr.mxu0 0.0
        %450 = vmatpush2.msra.mxu0 0.0
        %451 = vmatprep.mubr.f32.mxu0 0.0
        %452 = vmatmul.mubr.f32.gmra.mxu0 %v385
        %v453 = vpop.f32.mrf.mxu0
        %v454 = vadd.f32 %v311, %v453
        %v455 = vpop.f32.mrf.mxu0
        %v456 = vadd.f32 %v313, %v455
        %457 = vdwg.mxu0
        %458 = vmatprep.subr.mxu0 0.0
        %459 = vmatpush1.msra.mxu0 0.0
        %460 = vmatprep.subr.mxu0 0.0
        %461 = vmatpush1.msra.mxu0 0.0
        %462 = vmatprep.subr.mxu0 0.0
        %463 = vmatpush1.msra.mxu0 0.0
        %464 = vmatprep.subr.mxu0 0.0
        %465 = vmatpush1.msra.mxu0 0.0
        %466 = vmatprep.subr.mxu0 0.0
        %467 = vmatpush1.msra.mxu0 0.0
        %468 = vmatprep.subr.mxu0 0.0
        %469 = vmatpush1.msra.mxu0 0.0
        %470 = vmatprep.subr.mxu0 0.0
        %471 = vmatpush1.msra.mxu0 0.0
        %472 = vmatprep.subr.mxu0 0.0
        %473 = vmatpush1.msra.mxu0 0.0
        %474 = vmatprep.subr.mxu0 0.0
        %475 = vmatpush1.msra.mxu0 0.0
        %476 = vmatprep.subr.mxu0 0.0
        %477 = vmatpush1.msra.mxu0 0.0
        %478 = vmatprep.subr.mxu0 0.0
        %479 = vmatpush1.msra.mxu0 0.0
        %480 = vmatprep.subr.mxu0 0.0
        %481 = vmatpush1.msra.mxu0 0.0
        %482 = vmatprep.subr.mxu0 0.0
        %483 = vmatpush1.msra.mxu0 0.0
        %484 = vmatprep.subr.mxu0 0.0
        %485 = vmatpush1.msra.mxu0 0.0
        %486 = vmatprep.subr.mxu0 0.0
        %487 = vmatpush1.msra.mxu0 0.0
        %488 = vmatprep.subr.mxu0 0.0
        %489 = vmatpush1.msra.mxu0 %v221
        %490 = vmatprep.subr.mxu0 0.0
        %491 = vmatpush2.msra.mxu0 0.0
        %492 = vmatprep.subr.mxu0 0.0
        %493 = vmatpush2.msra.mxu0 0.0
        %494 = vmatprep.subr.mxu0 0.0
        %495 = vmatpush2.msra.mxu0 0.0
        %496 = vmatprep.subr.mxu0 0.0
        %497 = vmatpush2.msra.mxu0 0.0
        %498 = vmatprep.subr.mxu0 0.0
        %499 = vmatpush2.msra.mxu0 0.0
        %500 = vmatprep.subr.mxu0 0.0
        %501 = vmatpush2.msra.mxu0 0.0
        %502 = vmatprep.subr.mxu0 0.0
        %503 = vmatpush2.msra.mxu0 0.0
        %504 = vmatprep.subr.mxu0 0.0
        %505 = vmatpush2.msra.mxu0 0.0
        %506 = vmatprep.subr.mxu0 0.0
        %507 = vmatpush2.msra.mxu0 0.0
        %508 = vmatprep.subr.mxu0 0.0
        %509 = vmatpush2.msra.mxu0 0.0
        %510 = vmatprep.subr.mxu0 0.0
        %511 = vmatpush2.msra.mxu0 0.0
        %512 = vmatprep.subr.mxu0 0.0
        %513 = vmatpush2.msra.mxu0 0.0
        %514 = vmatprep.subr.mxu0 0.0
        %515 = vmatpush2.msra.mxu0 0.0
        %516 = vmatprep.subr.mxu0 0.0
        %517 = vmatpush2.msra.mxu0 0.0
        %518 = vmatprep.subr.mxu0 0.0
        %519 = vmatpush2.msra.mxu0 0.0
        %520 = vmatprep.subr.mxu0 0.0
        %521 = vmatpush2.msra.mxu0 0.0
        %522 = vmatprep.mubr.f32.mxu0 0.0
        %523 = vmatmul.mubr.f32.gmra.mxu0 %v385
        %v524 = vpop.f32.mrf.mxu0
        %v525 = vadd.f32 %v382, %v524
        %v526 = vpop.f32.mrf.mxu0
        %527 = vdwg.mxu0
        %528 = vrot.lane.b32.xlu0 %v222, 112
        %v529 = vpop.permute.xlu0 %528
        %530 = vrot.lane.b32.xlu0 %v219, 126
        %v531 = vpop.permute.xlu0 %530
        %532 = vrot.lane.b32.xlu0 %v220, 126
        %v533 = vpop.permute.xlu0 %532
        %534 = vrot.lane.b32.xlu0 %v221, 126
        %v535 = vpop.permute.xlu0 %534
        %vm536 = vcmask 1031168
        %v537 = vsel %vm536, %v531, %v533
        %v538 = vsel %vm536, %v533, %v535
        %v542 = vsel %vm241, %v529, 0
        %544 = vmatprep.subr.mxu0 0.0
        %545 = vmatpush1.msra.mxu0 0.0
        %546 = vmatprep.subr.mxu0 0.0
        %547 = vmatpush1.msra.mxu0 0.0
        %548 = vmatprep.subr.mxu0 0.0
        %549 = vmatpush1.msra.mxu0 0.0
        %550 = vmatprep.subr.mxu0 0.0
        %551 = vmatpush1.msra.mxu0 0.0
        %552 = vmatprep.subr.mxu0 0.0
        %553 = vmatpush1.msra.mxu0 0.0
        %554 = vmatprep.subr.mxu0 0.0
        %555 = vmatpush1.msra.mxu0 0.0
        %556 = vmatprep.subr.mxu0 0.0
        %557 = vmatpush1.msra.mxu0 0.0
        %558 = vmatprep.subr.mxu0 0.0
        %559 = vmatpush1.msra.mxu0 0.0
        %560 = vmatprep.subr.mxu0 0.0
        %561 = vmatpush1.msra.mxu0 0.0
        %562 = vmatprep.subr.mxu0 0.0
        %563 = vmatpush1.msra.mxu0 0.0
        %564 = vmatprep.subr.mxu0 0.0
        %565 = vmatpush1.msra.mxu0 0.0
        %566 = vmatprep.subr.mxu0 0.0
        %567 = vmatpush1.msra.mxu0 0.0
        %568 = vmatprep.subr.mxu0 0.0
        %569 = vmatpush1.msra.mxu0 0.0
        %570 = vmatprep.subr.mxu0 0.0
        %571 = vmatpush1.msra.mxu0 0.0
        %572 = vmatprep.subr.mxu0 0.0
        %573 = vmatpush1.msra.mxu0 0.0
        %574 = vmatprep.subr.mxu0 %v538
        %575 = vmatpush1.msra.mxu0 %v537
        %576 = vmatprep.subr.mxu0 0.0
        %577 = vmatpush2.msra.mxu0 0.0
        %578 = vmatprep.subr.mxu0 0.0
        %579 = vmatpush2.msra.mxu0 0.0
        %580 = vmatprep.subr.mxu0 0.0
        %581 = vmatpush2.msra.mxu0 0.0
        %582 = vmatprep.subr.mxu0 0.0
        %583 = vmatpush2.msra.mxu0 0.0
        %584 = vmatprep.subr.mxu0 0.0
        %585 = vmatpush2.msra.mxu0 0.0
        %586 = vmatprep.subr.mxu0 0.0
        %587 = vmatpush2.msra.mxu0 0.0
        %588 = vmatprep.subr.mxu0 0.0
        %589 = vmatpush2.msra.mxu0 0.0
        %590 = vmatprep.subr.mxu0 0.0
        %591 = vmatpush2.msra.mxu0 0.0
        %592 = vmatprep.subr.mxu0 0.0
        %593 = vmatpush2.msra.mxu0 0.0
        %594 = vmatprep.subr.mxu0 0.0
        %595 = vmatpush2.msra.mxu0 0.0
        %596 = vmatprep.subr.mxu0 0.0
        %597 = vmatpush2.msra.mxu0 0.0
        %598 = vmatprep.subr.mxu0 0.0
        %599 = vmatpush2.msra.mxu0 0.0
        %600 = vmatprep.subr.mxu0 0.0
        %601 = vmatpush2.msra.mxu0 0.0
        %602 = vmatprep.subr.mxu0 0.0
        %603 = vmatpush2.msra.mxu0 0.0
        %604 = vmatprep.subr.mxu0 0.0
        %605 = vmatpush2.msra.mxu0 0.0
        %606 = vmatprep.subr.mxu0 0.0
        %607 = vmatpush2.msra.mxu0 0.0
        %608 = vmatprep.mubr.f32.mxu0 0.0
        %609 = vmatmul.mubr.f32.gmra.mxu0 %v542
        %v610 = vpop.f32.mrf.mxu0
        %v611 = vadd.f32 0.0, %v610
        %v612 = vpop.f32.mrf.mxu0
        %v613 = vadd.f32 0.0, %v612
        %614 = vdwg.mxu0
        %615 = vmatprep.subr.mxu0 0.0
        %616 = vmatpush1.msra.mxu0 0.0
        %617 = vmatprep.subr.mxu0 0.0
        %618 = vmatpush1.msra.mxu0 0.0
        %619 = vmatprep.subr.mxu0 0.0
        %620 = vmatpush1.msra.mxu0 0.0
        %621 = vmatprep.subr.mxu0 0.0
        %622 = vmatpush1.msra.mxu0 0.0
        %623 = vmatprep.subr.mxu0 0.0
        %624 = vmatpush1.msra.mxu0 0.0
        %625 = vmatprep.subr.mxu0 0.0
        %626 = vmatpush1.msra.mxu0 0.0
        %627 = vmatprep.subr.mxu0 0.0
        %628 = vmatpush1.msra.mxu0 0.0
        %629 = vmatprep.subr.mxu0 0.0
        %630 = vmatpush1.msra.mxu0 0.0
        %631 = vmatprep.subr.mxu0 0.0
        %632 = vmatpush1.msra.mxu0 0.0
        %633 = vmatprep.subr.mxu0 0.0
        %634 = vmatpush1.msra.mxu0 0.0
        %635 = vmatprep.subr.mxu0 0.0
        %636 = vmatpush1.msra.mxu0 0.0
        %637 = vmatprep.subr.mxu0 0.0
        %638 = vmatpush1.msra.mxu0 0.0
        %639 = vmatprep.subr.mxu0 0.0
        %640 = vmatpush1.msra.mxu0 0.0
        %641 = vmatprep.subr.mxu0 0.0
        %642 = vmatpush1.msra.mxu0 0.0
        %643 = vmatprep.subr.mxu0 0.0
        %644 = vmatpush1.msra.mxu0 0.0
        %645 = vmatprep.subr.mxu0 0.0
        %646 = vmatpush1.msra.mxu0 %v535
        %647 = vmatprep.subr.mxu0 0.0
        %648 = vmatpush2.msra.mxu0 0.0
        %649 = vmatprep.subr.mxu0 0.0
        %650 = vmatpush2.msra.mxu0 0.0
        %651 = vmatprep.subr.mxu0 0.0
        %652 = vmatpush2.msra.mxu0 0.0
        %653 = vmatprep.subr.mxu0 0.0
        %654 = vmatpush2.msra.mxu0 0.0
        %655 = vmatprep.subr.mxu0 0.0
        %656 = vmatpush2.msra.mxu0 0.0
        %657 = vmatprep.subr.mxu0 0.0
        %658 = vmatpush2.msra.mxu0 0.0
        %659 = vmatprep.subr.mxu0 0.0
        %660 = vmatpush2.msra.mxu0 0.0
        %661 = vmatprep.subr.mxu0 0.0
        %662 = vmatpush2.msra.mxu0 0.0
        %663 = vmatprep.subr.mxu0 0.0
        %664 = vmatpush2.msra.mxu0 0.0
        %665 = vmatprep.subr.mxu0 0.0
        %666 = vmatpush2.msra.mxu0 0.0
        %667 = vmatprep.subr.mxu0 0.0
        %668 = vmatpush2.msra.mxu0 0.0
        %669 = vmatprep.subr.mxu0 0.0
        %670 = vmatpush2.msra.mxu0 0.0
        %671 = vmatprep.subr.mxu0 0.0
        %672 = vmatpush2.msra.mxu0 0.0
        %673 = vmatprep.subr.mxu0 0.0
        %674 = vmatpush2.msra.mxu0 0.0
        %675 = vmatprep.subr.mxu0 0.0
        %676 = vmatpush2.msra.mxu0 0.0
        %677 = vmatprep.subr.mxu0 0.0
        %678 = vmatpush2.msra.mxu0 0.0
        %679 = vmatprep.mubr.f32.mxu0 0.0
        %680 = vmatmul.mubr.f32.gmra.mxu0 %v542
        %v681 = vpop.f32.mrf.mxu0
        %v682 = vadd.f32 0.0, %v681
        %v683 = vpop.f32.mrf.mxu0
        %684 = vdwg.mxu0
        %v685 = vadd.f32 %v454, %v611
        %v686 = vadd.f32 %v456, %v613
        %v687 = vadd.f32 %v525, %v682
        %688 = vrot.lane.b32.xlu0 %v222, 104
        %v689 = vpop.permute.xlu0 %688
        %690 = vrot.lane.b32.xlu0 %v219, 110
        %v691 = vpop.permute.xlu0 %690
        %692 = vrot.lane.b32.xlu0 %v220, 110
        %v693 = vpop.permute.xlu0 %692
        %694 = vrot.lane.b32.xlu0 %v221, 110
        %v695 = vpop.permute.xlu0 %694
        %vm696 = vcmask 900096
        %v697 = vsel %vm696, %v691, %v693
        %v698 = vsel %vm696, %v693, %v695
        %v702 = vsel %vm241, %v689, 0
        %704 = vmatprep.subr.mxu0 0.0
        %705 = vmatpush1.msra.mxu0 0.0
        %706 = vmatprep.subr.mxu0 0.0
        %707 = vmatpush1.msra.mxu0 0.0
        %708 = vmatprep.subr.mxu0 0.0
        %709 = vmatpush1.msra.mxu0 0.0
        %710 = vmatprep.subr.mxu0 0.0
        %711 = vmatpush1.msra.mxu0 0.0
        %712 = vmatprep.subr.mxu0 0.0
        %713 = vmatpush1.msra.mxu0 0.0
        %714 = vmatprep.subr.mxu0 0.0
        %715 = vmatpush1.msra.mxu0 0.0
        %716 = vmatprep.subr.mxu0 0.0
        %717 = vmatpush1.msra.mxu0 0.0
        %718 = vmatprep.subr.mxu0 0.0
        %719 = vmatpush1.msra.mxu0 0.0
        %720 = vmatprep.subr.mxu0 0.0
        %721 = vmatpush1.msra.mxu0 0.0
        %722 = vmatprep.subr.mxu0 0.0
        %723 = vmatpush1.msra.mxu0 0.0
        %724 = vmatprep.subr.mxu0 0.0
        %725 = vmatpush1.msra.mxu0 0.0
        %726 = vmatprep.subr.mxu0 0.0
        %727 = vmatpush1.msra.mxu0 0.0
        %728 = vmatprep.subr.mxu0 0.0
        %729 = vmatpush1.msra.mxu0 0.0
        %730 = vmatprep.subr.mxu0 0.0
        %731 = vmatpush1.msra.mxu0 0.0
        %732 = vmatprep.subr.mxu0 0.0
        %733 = vmatpush1.msra.mxu0 0.0
        %734 = vmatprep.subr.mxu0 %v698
        %735 = vmatpush1.msra.mxu0 %v697
        %736 = vmatprep.subr.mxu0 0.0
        %737 = vmatpush2.msra.mxu0 0.0
        %738 = vmatprep.subr.mxu0 0.0
        %739 = vmatpush2.msra.mxu0 0.0
        %740 = vmatprep.subr.mxu0 0.0
        %741 = vmatpush2.msra.mxu0 0.0
        %742 = vmatprep.subr.mxu0 0.0
        %743 = vmatpush2.msra.mxu0 0.0
        %744 = vmatprep.subr.mxu0 0.0
        %745 = vmatpush2.msra.mxu0 0.0
        %746 = vmatprep.subr.mxu0 0.0
        %747 = vmatpush2.msra.mxu0 0.0
        %748 = vmatprep.subr.mxu0 0.0
        %749 = vmatpush2.msra.mxu0 0.0
        %750 = vmatprep.subr.mxu0 0.0
        %751 = vmatpush2.msra.mxu0 0.0
        %752 = vmatprep.subr.mxu0 0.0
        %753 = vmatpush2.msra.mxu0 0.0
        %754 = vmatprep.subr.mxu0 0.0
        %755 = vmatpush2.msra.mxu0 0.0
        %756 = vmatprep.subr.mxu0 0.0
        %757 = vmatpush2.msra.mxu0 0.0
        %758 = vmatprep.subr.mxu0 0.0
        %759 = vmatpush2.msra.mxu0 0.0
        %760 = vmatprep.subr.mxu0 0.0
        %761 = vmatpush2.msra.mxu0 0.0
        %762 = vmatprep.subr.mxu0 0.0
        %763 = vmatpush2.msra.mxu0 0.0
        %764 = vmatprep.subr.mxu0 0.0
        %765 = vmatpush2.msra.mxu0 0.0
        %766 = vmatprep.subr.mxu0 0.0
        %767 = vmatpush2.msra.mxu0 0.0
        %768 = vmatprep.mubr.f32.mxu0 0.0
        %769 = vmatmul.mubr.f32.gmra.mxu0 %v702
        %v770 = vpop.f32.mrf.mxu0
        %v771 = vadd.f32 0.0, %v770
        %v772 = vpop.f32.mrf.mxu0
        %v773 = vadd.f32 0.0, %v772
        %774 = vdwg.mxu0
        %775 = vmatprep.subr.mxu0 0.0
        %776 = vmatpush1.msra.mxu0 0.0
        %777 = vmatprep.subr.mxu0 0.0
        %778 = vmatpush1.msra.mxu0 0.0
        %779 = vmatprep.subr.mxu0 0.0
        %780 = vmatpush1.msra.mxu0 0.0
        %781 = vmatprep.subr.mxu0 0.0
        %782 = vmatpush1.msra.mxu0 0.0
        %783 = vmatprep.subr.mxu0 0.0
        %784 = vmatpush1.msra.mxu0 0.0
        %785 = vmatprep.subr.mxu0 0.0
        %786 = vmatpush1.msra.mxu0 0.0
        %787 = vmatprep.subr.mxu0 0.0
        %788 = vmatpush1.msra.mxu0 0.0
        %789 = vmatprep.subr.mxu0 0.0
        %790 = vmatpush1.msra.mxu0 0.0
        %791 = vmatprep.subr.mxu0 0.0
        %792 = vmatpush1.msra.mxu0 0.0
        %793 = vmatprep.subr.mxu0 0.0
        %794 = vmatpush1.msra.mxu0 0.0
        %795 = vmatprep.subr.mxu0 0.0
        %796 = vmatpush1.msra.mxu0 0.0
        %797 = vmatprep.subr.mxu0 0.0
        %798 = vmatpush1.msra.mxu0 0.0
        %799 = vmatprep.subr.mxu0 0.0
        %800 = vmatpush1.msra.mxu0 0.0
        %801 = vmatprep.subr.mxu0 0.0
        %802 = vmatpush1.msra.mxu0 0.0
        %803 = vmatprep.subr.mxu0 0.0
        %804 = vmatpush1.msra.mxu0 0.0
        %805 = vmatprep.subr.mxu0 0.0
        %806 = vmatpush1.msra.mxu0 %v695
        %807 = vmatprep.subr.mxu0 0.0
        %808 = vmatpush2.msra.mxu0 0.0
        %809 = vmatprep.subr.mxu0 0.0
        %810 = vmatpush2.msra.mxu0 0.0
        %811 = vmatprep.subr.mxu0 0.0
        %812 = vmatpush2.msra.mxu0 0.0
        %813 = vmatprep.subr.mxu0 0.0
        %814 = vmatpush2.msra.mxu0 0.0
        %815 = vmatprep.subr.mxu0 0.0
        %816 = vmatpush2.msra.mxu0 0.0
        %817 = vmatprep.subr.mxu0 0.0
        %818 = vmatpush2.msra.mxu0 0.0
        %819 = vmatprep.subr.mxu0 0.0
        %820 = vmatpush2.msra.mxu0 0.0
        %821 = vmatprep.subr.mxu0 0.0
        %822 = vmatpush2.msra.mxu0 0.0
        %823 = vmatprep.subr.mxu0 0.0
        %824 = vmatpush2.msra.mxu0 0.0
        %825 = vmatprep.subr.mxu0 0.0
        %826 = vmatpush2.msra.mxu0 0.0
        %827 = vmatprep.subr.mxu0 0.0
        %828 = vmatpush2.msra.mxu0 0.0
        %829 = vmatprep.subr.mxu0 0.0
        %830 = vmatpush2.msra.mxu0 0.0
        %831 = vmatprep.subr.mxu0 0.0
        %832 = vmatpush2.msra.mxu0 0.0
        %833 = vmatprep.subr.mxu0 0.0
        %834 = vmatpush2.msra.mxu0 0.0
        %835 = vmatprep.subr.mxu0 0.0
        %836 = vmatpush2.msra.mxu0 0.0
        %837 = vmatprep.subr.mxu0 0.0
        %838 = vmatpush2.msra.mxu0 0.0
        %839 = vmatprep.mubr.f32.mxu0 0.0
        %840 = vmatmul.mubr.f32.gmra.mxu0 %v702
        %v841 = vpop.f32.mrf.mxu0
        %v842 = vadd.f32 0.0, %v841
        %v843 = vpop.f32.mrf.mxu0
        %844 = vdwg.mxu0
        %v845 = vadd.f32 %v685, %v771
        %v846 = vadd.f32 %v686, %v773
        %v847 = vadd.f32 %v687, %v842
        %848 = vrot.lane.b32.xlu0 %v222, 96
        %v849 = vpop.permute.xlu0 %848
        %850 = vrot.lane.b32.xlu0 %v219, 109
        %v851 = vpop.permute.xlu0 %850
        %852 = vrot.lane.b32.xlu0 %v220, 109
        %v853 = vpop.permute.xlu0 %852
        %854 = vrot.lane.b32.xlu0 %v221, 109
        %v855 = vpop.permute.xlu0 %854
        %vm856 = vcmask 891904
        %v857 = vsel %vm856, %v851, %v853
        %v858 = vsel %vm856, %v853, %v855
        %v862 = vsel %vm241, %v849, 0
        %864 = vmatprep.subr.mxu0 0.0
        %865 = vmatpush1.msra.mxu0 0.0
        %866 = vmatprep.subr.mxu0 0.0
        %867 = vmatpush1.msra.mxu0 0.0
        %868 = vmatprep.subr.mxu0 0.0
        %869 = vmatpush1.msra.mxu0 0.0
        %870 = vmatprep.subr.mxu0 0.0
        %871 = vmatpush1.msra.mxu0 0.0
        %872 = vmatprep.subr.mxu0 0.0
        %873 = vmatpush1.msra.mxu0 0.0
        %874 = vmatprep.subr.mxu0 0.0
        %875 = vmatpush1.msra.mxu0 0.0
        %876 = vmatprep.subr.mxu0 0.0
        %877 = vmatpush1.msra.mxu0 0.0
        %878 = vmatprep.subr.mxu0 0.0
        %879 = vmatpush1.msra.mxu0 0.0
        %880 = vmatprep.subr.mxu0 0.0
        %881 = vmatpush1.msra.mxu0 0.0
        %882 = vmatprep.subr.mxu0 0.0
        %883 = vmatpush1.msra.mxu0 0.0
        %884 = vmatprep.subr.mxu0 0.0
        %885 = vmatpush1.msra.mxu0 0.0
        %886 = vmatprep.subr.mxu0 0.0
        %887 = vmatpush1.msra.mxu0 0.0
        %888 = vmatprep.subr.mxu0 0.0
        %889 = vmatpush1.msra.mxu0 0.0
        %890 = vmatprep.subr.mxu0 0.0
        %891 = vmatpush1.msra.mxu0 0.0
        %892 = vmatprep.subr.mxu0 0.0
        %893 = vmatpush1.msra.mxu0 0.0
        %894 = vmatprep.subr.mxu0 %v858
        %895 = vmatpush1.msra.mxu0 %v857
        %896 = vmatprep.subr.mxu0 0.0
        %897 = vmatpush2.msra.mxu0 0.0
        %898 = vmatprep.subr.mxu0 0.0
        %899 = vmatpush2.msra.mxu0 0.0
        %900 = vmatprep.subr.mxu0 0.0
        %901 = vmatpush2.msra.mxu0 0.0
        %902 = vmatprep.subr.mxu0 0.0
        %903 = vmatpush2.msra.mxu0 0.0
        %904 = vmatprep.subr.mxu0 0.0
        %905 = vmatpush2.msra.mxu0 0.0
        %906 = vmatprep.subr.mxu0 0.0
        %907 = vmatpush2.msra.mxu0 0.0
        %908 = vmatprep.subr.mxu0 0.0
        %909 = vmatpush2.msra.mxu0 0.0
        %910 = vmatprep.subr.mxu0 0.0
        %911 = vmatpush2.msra.mxu0 0.0
        %912 = vmatprep.subr.mxu0 0.0
        %913 = vmatpush2.msra.mxu0 0.0
        %914 = vmatprep.subr.mxu0 0.0
        %915 = vmatpush2.msra.mxu0 0.0
        %916 = vmatprep.subr.mxu0 0.0
        %917 = vmatpush2.msra.mxu0 0.0
        %918 = vmatprep.subr.mxu0 0.0
        %919 = vmatpush2.msra.mxu0 0.0
        %920 = vmatprep.subr.mxu0 0.0
        %921 = vmatpush2.msra.mxu0 0.0
        %922 = vmatprep.subr.mxu0 0.0
        %923 = vmatpush2.msra.mxu0 0.0
        %924 = vmatprep.subr.mxu0 0.0
        %925 = vmatpush2.msra.mxu0 0.0
        %926 = vmatprep.subr.mxu0 0.0
        %927 = vmatpush2.msra.mxu0 0.0
        %928 = vmatprep.mubr.f32.mxu0 0.0
        %929 = vmatmul.mubr.f32.gmra.mxu0 %v862
        %v930 = vpop.f32.mrf.mxu0
        %v931 = vadd.f32 0.0, %v930
        %v932 = vpop.f32.mrf.mxu0
        %v933 = vadd.f32 0.0, %v932
        %934 = vdwg.mxu0
        %935 = vmatprep.subr.mxu0 0.0
        %936 = vmatpush1.msra.mxu0 0.0
        %937 = vmatprep.subr.mxu0 0.0
        %938 = vmatpush1.msra.mxu0 0.0
        %939 = vmatprep.subr.mxu0 0.0
        %940 = vmatpush1.msra.mxu0 0.0
        %941 = vmatprep.subr.mxu0 0.0
        %942 = vmatpush1.msra.mxu0 0.0
        %943 = vmatprep.subr.mxu0 0.0
        %944 = vmatpush1.msra.mxu0 0.0
        %945 = vmatprep.subr.mxu0 0.0
        %946 = vmatpush1.msra.mxu0 0.0
        %947 = vmatprep.subr.mxu0 0.0
        %948 = vmatpush1.msra.mxu0 0.0
        %949 = vmatprep.subr.mxu0 0.0
        %950 = vmatpush1.msra.mxu0 0.0
        %951 = vmatprep.subr.mxu0 0.0
        %952 = vmatpush1.msra.mxu0 0.0
        %953 = vmatprep.subr.mxu0 0.0
        %954 = vmatpush1.msra.mxu0 0.0
        %955 = vmatprep.subr.mxu0 0.0
        %956 = vmatpush1.msra.mxu0 0.0
        %957 = vmatprep.subr.mxu0 0.0
        %958 = vmatpush1.msra.mxu0 0.0
        %959 = vmatprep.subr.mxu0 0.0
        %960 = vmatpush1.msra.mxu0 0.0
        %961 = vmatprep.subr.mxu0 0.0
        %962 = vmatpush1.msra.mxu0 0.0
        %963 = vmatprep.subr.mxu0 0.0
        %964 = vmatpush1.msra.mxu0 0.0
        %965 = vmatprep.subr.mxu0 0.0
        %966 = vmatpush1.msra.mxu0 %v855
        %967 = vmatprep.subr.mxu0 0.0
        %968 = vmatpush2.msra.mxu0 0.0
        %969 = vmatprep.subr.mxu0 0.0
        %970 = vmatpush2.msra.mxu0 0.0
        %971 = vmatprep.subr.mxu0 0.0
        %972 = vmatpush2.msra.mxu0 0.0
        %973 = vmatprep.subr.mxu0 0.0
        %974 = vmatpush2.msra.mxu0 0.0
        %975 = vmatprep.subr.mxu0 0.0
        %976 = vmatpush2.msra.mxu0 0.0
        %977 = vmatprep.subr.mxu0 0.0
        %978 = vmatpush2.msra.mxu0 0.0
        %979 = vmatprep.subr.mxu0 0.0
        %980 = vmatpush2.msra.mxu0 0.0
        %981 = vmatprep.subr.mxu0 0.0
        %982 = vmatpush2.msra.mxu0 0.0
        %983 = vmatprep.subr.mxu0 0.0
        %984 = vmatpush2.msra.mxu0 0.0
        %985 = vmatprep.subr.mxu0 0.0
        %986 = vmatpush2.msra.mxu0 0.0
        %987 = vmatprep.subr.mxu0 0.0
        %988 = vmatpush2.msra.mxu0 0.0
        %989 = vmatprep.subr.mxu0 0.0
        %990 = vmatpush2.msra.mxu0 0.0
        %991 = vmatprep.subr.mxu0 0.0
        %992 = vmatpush2.msra.mxu0 0.0
        %993 = vmatprep.subr.mxu0 0.0
        %994 = vmatpush2.msra.mxu0 0.0
        %995 = vmatprep.subr.mxu0 0.0
        %996 = vmatpush2.msra.mxu0 0.0
        %997 = vmatprep.subr.mxu0 0.0
        %998 = vmatpush2.msra.mxu0 0.0
        %999 = vmatprep.mubr.f32.mxu0 0.0
        %1000 = vmatmul.mubr.f32.gmra.mxu0 %v862
        %v1001 = vpop.f32.mrf.mxu0
        %v1002 = vadd.f32 0.0, %v1001
        %v1003 = vpop.f32.mrf.mxu0
        %1004 = vdwg.mxu0
        %v1005 = vadd.f32 %v845, %v931
        %v1006 = vadd.f32 %v846, %v933
        %v1007 = vadd.f32 %v847, %v1002
        %1008 = vrot.lane.b32.xlu0 %v222, 88
        %v1009 = vpop.permute.xlu0 %1008
        %1010 = vrot.lane.b32.xlu0 %v219, 108
        %v1011 = vpop.permute.xlu0 %1010
        %1012 = vrot.lane.b32.xlu0 %v220, 108
        %v1013 = vpop.permute.xlu0 %1012
        %1014 = vrot.lane.b32.xlu0 %v221, 108
        %v1015 = vpop.permute.xlu0 %1014
        %vm1016 = vcmask 883712
        %v1017 = vsel %vm1016, %v1011, %v1013
        %v1018 = vsel %vm1016, %v1013, %v1015
        %v1022 = vsel %vm241, %v1009, 0
        %1024 = vmatprep.subr.mxu0 0.0
        %1025 = vmatpush1.msra.mxu0 0.0
        %1026 = vmatprep.subr.mxu0 0.0
        %1027 = vmatpush1.msra.mxu0 0.0
        %1028 = vmatprep.subr.mxu0 0.0
        %1029 = vmatpush1.msra.mxu0 0.0
        %1030 = vmatprep.subr.mxu0 0.0
        %1031 = vmatpush1.msra.mxu0 0.0
        %1032 = vmatprep.subr.mxu0 0.0
        %1033 = vmatpush1.msra.mxu0 0.0
        %1034 = vmatprep.subr.mxu0 0.0
        %1035 = vmatpush1.msra.mxu0 0.0
        %1036 = vmatprep.subr.mxu0 0.0
        %1037 = vmatpush1.msra.mxu0 0.0
        %1038 = vmatprep.subr.mxu0 0.0
        %1039 = vmatpush1.msra.mxu0 0.0
        %1040 = vmatprep.subr.mxu0 0.0
        %1041 = vmatpush1.msra.mxu0 0.0
        %1042 = vmatprep.subr.mxu0 0.0
        %1043 = vmatpush1.msra.mxu0 0.0
        %1044 = vmatprep.subr.mxu0 0.0
        %1045 = vmatpush1.msra.mxu0 0.0
        %1046 = vmatprep.subr.mxu0 0.0
        %1047 = vmatpush1.msra.mxu0 0.0
        %1048 = vmatprep.subr.mxu0 0.0
        %1049 = vmatpush1.msra.mxu0 0.0
        %1050 = vmatprep.subr.mxu0 0.0
        %1051 = vmatpush1.msra.mxu0 0.0
        %1052 = vmatprep.subr.mxu0 0.0
        %1053 = vmatpush1.msra.mxu0 0.0
        %1054 = vmatprep.subr.mxu0 %v1018
        %1055 = vmatpush1.msra.mxu0 %v1017
        %1056 = vmatprep.subr.mxu0 0.0
        %1057 = vmatpush2.msra.mxu0 0.0
        %1058 = vmatprep.subr.mxu0 0.0
        %1059 = vmatpush2.msra.mxu0 0.0
        %1060 = vmatprep.subr.mxu0 0.0
        %1061 = vmatpush2.msra.mxu0 0.0
        %1062 = vmatprep.subr.mxu0 0.0
        %1063 = vmatpush2.msra.mxu0 0.0
        %1064 = vmatprep.subr.mxu0 0.0
        %1065 = vmatpush2.msra.mxu0 0.0
        %1066 = vmatprep.subr.mxu0 0.0
        %1067 = vmatpush2.msra.mxu0 0.0
        %1068 = vmatprep.subr.mxu0 0.0
        %1069 = vmatpush2.msra.mxu0 0.0
        %1070 = vmatprep.subr.mxu0 0.0
        %1071 = vmatpush2.msra.mxu0 0.0
        %1072 = vmatprep.subr.mxu0 0.0
        %1073 = vmatpush2.msra.mxu0 0.0
        %1074 = vmatprep.subr.mxu0 0.0
        %1075 = vmatpush2.msra.mxu0 0.0
        %1076 = vmatprep.subr.mxu0 0.0
        %1077 = vmatpush2.msra.mxu0 0.0
        %1078 = vmatprep.subr.mxu0 0.0
        %1079 = vmatpush2.msra.mxu0 0.0
        %1080 = vmatprep.subr.mxu0 0.0
        %1081 = vmatpush2.msra.mxu0 0.0
        %1082 = vmatprep.subr.mxu0 0.0
        %1083 = vmatpush2.msra.mxu0 0.0
        %1084 = vmatprep.subr.mxu0 0.0
        %1085 = vmatpush2.msra.mxu0 0.0
        %1086 = vmatprep.subr.mxu0 0.0
        %1087 = vmatpush2.msra.mxu0 0.0
        %1088 = vmatprep.mubr.f32.mxu0 0.0
        %1089 = vmatmul.mubr.f32.gmra.mxu0 %v1022
        %v1090 = vpop.f32.mrf.mxu0
        %v1091 = vadd.f32 0.0, %v1090
        %v1092 = vpop.f32.mrf.mxu0
        %v1093 = vadd.f32 0.0, %v1092
        %1094 = vdwg.mxu0
        %1095 = vmatprep.subr.mxu0 0.0
        %1096 = vmatpush1.msra.mxu0 0.0
        %1097 = vmatprep.subr.mxu0 0.0
        %1098 = vmatpush1.msra.mxu0 0.0
        %1099 = vmatprep.subr.mxu0 0.0
        %1100 = vmatpush1.msra.mxu0 0.0
        %1101 = vmatprep.subr.mxu0 0.0
        %1102 = vmatpush1.msra.mxu0 0.0
        %1103 = vmatprep.subr.mxu0 0.0
        %1104 = vmatpush1.msra.mxu0 0.0
        %1105 = vmatprep.subr.mxu0 0.0
        %1106 = vmatpush1.msra.mxu0 0.0
        %1107 = vmatprep.subr.mxu0 0.0
        %1108 = vmatpush1.msra.mxu0 0.0
        %1109 = vmatprep.subr.mxu0 0.0
        %1110 = vmatpush1.msra.mxu0 0.0
        %1111 = vmatprep.subr.mxu0 0.0
        %1112 = vmatpush1.msra.mxu0 0.0
        %1113 = vmatprep.subr.mxu0 0.0
        %1114 = vmatpush1.msra.mxu0 0.0
        %1115 = vmatprep.subr.mxu0 0.0
        %1116 = vmatpush1.msra.mxu0 0.0
        %1117 = vmatprep.subr.mxu0 0.0
        %1118 = vmatpush1.msra.mxu0 0.0
        %1119 = vmatprep.subr.mxu0 0.0
        %1120 = vmatpush1.msra.mxu0 0.0
        %1121 = vmatprep.subr.mxu0 0.0
        %1122 = vmatpush1.msra.mxu0 0.0
        %1123 = vmatprep.subr.mxu0 0.0
        %1124 = vmatpush1.msra.mxu0 0.0
        %1125 = vmatprep.subr.mxu0 0.0
        %1126 = vmatpush1.msra.mxu0 %v1015
        %1127 = vmatprep.subr.mxu0 0.0
        %1128 = vmatpush2.msra.mxu0 0.0
        %1129 = vmatprep.subr.mxu0 0.0
        %1130 = vmatpush2.msra.mxu0 0.0
        %1131 = vmatprep.subr.mxu0 0.0
        %1132 = vmatpush2.msra.mxu0 0.0
        %1133 = vmatprep.subr.mxu0 0.0
        %1134 = vmatpush2.msra.mxu0 0.0
        %1135 = vmatprep.subr.mxu0 0.0
        %1136 = vmatpush2.msra.mxu0 0.0
        %1137 = vmatprep.subr.mxu0 0.0
        %1138 = vmatpush2.msra.mxu0 0.0
        %1139 = vmatprep.subr.mxu0 0.0
        %1140 = vmatpush2.msra.mxu0 0.0
        %1141 = vmatprep.subr.mxu0 0.0
        %1142 = vmatpush2.msra.mxu0 0.0
        %1143 = vmatprep.subr.mxu0 0.0
        %1144 = vmatpush2.msra.mxu0 0.0
        %1145 = vmatprep.subr.mxu0 0.0
        %1146 = vmatpush2.msra.mxu0 0.0
        %1147 = vmatprep.subr.mxu0 0.0
        %1148 = vmatpush2.msra.mxu0 0.0
        %1149 = vmatprep.subr.mxu0 0.0
        %1150 = vmatpush2.msra.mxu0 0.0
        %1151 = vmatprep.subr.mxu0 0.0
        %1152 = vmatpush2.msra.mxu0 0.0
        %1153 = vmatprep.subr.mxu0 0.0
        %1154 = vmatpush2.msra.mxu0 0.0
        %1155 = vmatprep.subr.mxu0 0.0
        %1156 = vmatpush2.msra.mxu0 0.0
        %1157 = vmatprep.subr.mxu0 0.0
        %1158 = vmatpush2.msra.mxu0 0.0
        %1159 = vmatprep.mubr.f32.mxu0 0.0
        %1160 = vmatmul.mubr.f32.gmra.mxu0 %v1022
        %v1161 = vpop.f32.mrf.mxu0
        %v1162 = vadd.f32 0.0, %v1161
        %v1163 = vpop.f32.mrf.mxu0
        %1164 = vdwg.mxu0
        %v1165 = vadd.f32 %v1005, %v1091
        %v1166 = vadd.f32 %v1006, %v1093
        %v1167 = vadd.f32 %v1007, %v1162
        %1168 = vrot.lane.b32.xlu0 %v222, 80
        %v1169 = vpop.permute.xlu0 %1168
        %1170 = vrot.lane.b32.xlu0 %v219, 92
        %v1171 = vpop.permute.xlu0 %1170
        %1172 = vrot.lane.b32.xlu0 %v220, 92
        %v1173 = vpop.permute.xlu0 %1172
        %1174 = vrot.lane.b32.xlu0 %v221, 92
        %v1175 = vpop.permute.xlu0 %1174
        %vm1176 = vcmask 752640
        %v1177 = vsel %vm1176, %v1171, %v1173
        %v1178 = vsel %vm1176, %v1173, %v1175
        %v1182 = vsel %vm241, %v1169, 0
        %1184 = vmatprep.subr.mxu0 0.0
        %1185 = vmatpush1.msra.mxu0 0.0
        %1186 = vmatprep.subr.mxu0 0.0
        %1187 = vmatpush1.msra.mxu0 0.0
        %1188 = vmatprep.subr.mxu0 0.0
        %1189 = vmatpush1.msra.mxu0 0.0
        %1190 = vmatprep.subr.mxu0 0.0
        %1191 = vmatpush1.msra.mxu0 0.0
        %1192 = vmatprep.subr.mxu0 0.0
        %1193 = vmatpush1.msra.mxu0 0.0
        %1194 = vmatprep.subr.mxu0 0.0
        %1195 = vmatpush1.msra.mxu0 0.0
        %1196 = vmatprep.subr.mxu0 0.0
        %1197 = vmatpush1.msra.mxu0 0.0
        %1198 = vmatprep.subr.mxu0 0.0
        %1199 = vmatpush1.msra.mxu0 0.0
        %1200 = vmatprep.subr.mxu0 0.0
        %1201 = vmatpush1.msra.mxu0 0.0
        %1202 = vmatprep.subr.mxu0 0.0
        %1203 = vmatpush1.msra.mxu0 0.0
        %1204 = vmatprep.subr.mxu0 0.0
        %1205 = vmatpush1.msra.mxu0 0.0
        %1206 = vmatprep.subr.mxu0 0.0
        %1207 = vmatpush1.msra.mxu0 0.0
        %1208 = vmatprep.subr.mxu0 0.0
        %1209 = vmatpush1.msra.mxu0 0.0
        %1210 = vmatprep.subr.mxu0 0.0
        %1211 = vmatpush1.msra.mxu0 0.0
        %1212 = vmatprep.subr.mxu0 0.0
        %1213 = vmatpush1.msra.mxu0 0.0
        %1214 = vmatprep.subr.mxu0 %v1178
        %1215 = vmatpush1.msra.mxu0 %v1177
        %1216 = vmatprep.subr.mxu0 0.0
        %1217 = vmatpush2.msra.mxu0 0.0
        %1218 = vmatprep.subr.mxu0 0.0
        %1219 = vmatpush2.msra.mxu0 0.0
        %1220 = vmatprep.subr.mxu0 0.0
        %1221 = vmatpush2.msra.mxu0 0.0
        %1222 = vmatprep.subr.mxu0 0.0
        %1223 = vmatpush2.msra.mxu0 0.0
        %1224 = vmatprep.subr.mxu0 0.0
        %1225 = vmatpush2.msra.mxu0 0.0
        %1226 = vmatprep.subr.mxu0 0.0
        %1227 = vmatpush2.msra.mxu0 0.0
        %1228 = vmatprep.subr.mxu0 0.0
        %1229 = vmatpush2.msra.mxu0 0.0
        %1230 = vmatprep.subr.mxu0 0.0
        %1231 = vmatpush2.msra.mxu0 0.0
        %1232 = vmatprep.subr.mxu0 0.0
        %1233 = vmatpush2.msra.mxu0 0.0
        %1234 = vmatprep.subr.mxu0 0.0
        %1235 = vmatpush2.msra.mxu0 0.0
        %1236 = vmatprep.subr.mxu0 0.0
        %1237 = vmatpush2.msra.mxu0 0.0
        %1238 = vmatprep.subr.mxu0 0.0
        %1239 = vmatpush2.msra.mxu0 0.0
        %1240 = vmatprep.subr.mxu0 0.0
        %1241 = vmatpush2.msra.mxu0 0.0
        %1242 = vmatprep.subr.mxu0 0.0
        %1243 = vmatpush2.msra.mxu0 0.0
        %1244 = vmatprep.subr.mxu0 0.0
        %1245 = vmatpush2.msra.mxu0 0.0
        %1246 = vmatprep.subr.mxu0 0.0
        %1247 = vmatpush2.msra.mxu0 0.0
        %1248 = vmatprep.mubr.f32.mxu0 0.0
        %1249 = vmatmul.mubr.f32.gmra.mxu0 %v1182
        %v1250 = vpop.f32.mrf.mxu0
        %v1251 = vadd.f32 0.0, %v1250
        %v1252 = vpop.f32.mrf.mxu0
        %v1253 = vadd.f32 0.0, %v1252
        %1254 = vdwg.mxu0
        %1255 = vmatprep.subr.mxu0 0.0
        %1256 = vmatpush1.msra.mxu0 0.0
        %1257 = vmatprep.subr.mxu0 0.0
        %1258 = vmatpush1.msra.mxu0 0.0
        %1259 = vmatprep.subr.mxu0 0.0
        %1260 = vmatpush1.msra.mxu0 0.0
        %1261 = vmatprep.subr.mxu0 0.0
        %1262 = vmatpush1.msra.mxu0 0.0
        %1263 = vmatprep.subr.mxu0 0.0
        %1264 = vmatpush1.msra.mxu0 0.0
        %1265 = vmatprep.subr.mxu0 0.0
        %1266 = vmatpush1.msra.mxu0 0.0
        %1267 = vmatprep.subr.mxu0 0.0
        %1268 = vmatpush1.msra.mxu0 0.0
        %1269 = vmatprep.subr.mxu0 0.0
        %1270 = vmatpush1.msra.mxu0 0.0
        %1271 = vmatprep.subr.mxu0 0.0
        %1272 = vmatpush1.msra.mxu0 0.0
        %1273 = vmatprep.subr.mxu0 0.0
        %1274 = vmatpush1.msra.mxu0 0.0
        %1275 = vmatprep.subr.mxu0 0.0
        %1276 = vmatpush1.msra.mxu0 0.0
        %1277 = vmatprep.subr.mxu0 0.0
        %1278 = vmatpush1.msra.mxu0 0.0
        %1279 = vmatprep.subr.mxu0 0.0
        %1280 = vmatpush1.msra.mxu0 0.0
        %1281 = vmatprep.subr.mxu0 0.0
        %1282 = vmatpush1.msra.mxu0 0.0
        %1283 = vmatprep.subr.mxu0 0.0
        %1284 = vmatpush1.msra.mxu0 0.0
        %1285 = vmatprep.subr.mxu0 0.0
        %1286 = vmatpush1.msra.mxu0 %v1175
        %1287 = vmatprep.subr.mxu0 0.0
        %1288 = vmatpush2.msra.mxu0 0.0
        %1289 = vmatprep.subr.mxu0 0.0
        %1290 = vmatpush2.msra.mxu0 0.0
        %1291 = vmatprep.subr.mxu0 0.0
        %1292 = vmatpush2.msra.mxu0 0.0
        %1293 = vmatprep.subr.mxu0 0.0
        %1294 = vmatpush2.msra.mxu0 0.0
        %1295 = vmatprep.subr.mxu0 0.0
        %1296 = vmatpush2.msra.mxu0 0.0
        %1297 = vmatprep.subr.mxu0 0.0
        %1298 = vmatpush2.msra.mxu0 0.0
        %1299 = vmatprep.subr.mxu0 0.0
        %1300 = vmatpush2.msra.mxu0 0.0
        %1301 = vmatprep.subr.mxu0 0.0
        %1302 = vmatpush2.msra.mxu0 0.0
        %1303 = vmatprep.subr.mxu0 0.0
        %1304 = vmatpush2.msra.mxu0 0.0
        %1305 = vmatprep.subr.mxu0 0.0
        %1306 = vmatpush2.msra.mxu0 0.0
        %1307 = vmatprep.subr.mxu0 0.0
        %1308 = vmatpush2.msra.mxu0 0.0
        %1309 = vmatprep.subr.mxu0 0.0
        %1310 = vmatpush2.msra.mxu0 0.0
        %1311 = vmatprep.subr.mxu0 0.0
        %1312 = vmatpush2.msra.mxu0 0.0
        %1313 = vmatprep.subr.mxu0 0.0
        %1314 = vmatpush2.msra.mxu0 0.0
        %1315 = vmatprep.subr.mxu0 0.0
        %1316 = vmatpush2.msra.mxu0 0.0
        %1317 = vmatprep.subr.mxu0 0.0
        %1318 = vmatpush2.msra.mxu0 0.0
        %1319 = vmatprep.mubr.f32.mxu0 0.0
        %1320 = vmatmul.mubr.f32.gmra.mxu0 %v1182
        %v1321 = vpop.f32.mrf.mxu0
        %v1322 = vadd.f32 0.0, %v1321
        %v1323 = vpop.f32.mrf.mxu0
        %1324 = vdwg.mxu0
        %v1325 = vadd.f32 %v1165, %v1251
        %v1326 = vadd.f32 %v1166, %v1253
        %v1327 = vadd.f32 %v1167, %v1322
        %1328 = vrot.lane.b32.xlu0 %v222, 72
        %v1329 = vpop.permute.xlu0 %1328
        %1330 = vrot.lane.b32.xlu0 %v219, 91
        %v1331 = vpop.permute.xlu0 %1330
        %1332 = vrot.lane.b32.xlu0 %v220, 91
        %v1333 = vpop.permute.xlu0 %1332
        %1334 = vrot.lane.b32.xlu0 %v221, 91
        %v1335 = vpop.permute.xlu0 %1334
        %vm1336 = vcmask 744448
        %v1337 = vsel %vm1336, %v1331, %v1333
        %v1338 = vsel %vm1336, %v1333, %v1335
        %v1342 = vsel %vm241, %v1329, 0
        %1344 = vmatprep.subr.mxu0 0.0
        %1345 = vmatpush1.msra.mxu0 0.0
        %1346 = vmatprep.subr.mxu0 0.0
        %1347 = vmatpush1.msra.mxu0 0.0
        %1348 = vmatprep.subr.mxu0 0.0
        %1349 = vmatpush1.msra.mxu0 0.0
        %1350 = vmatprep.subr.mxu0 0.0
        %1351 = vmatpush1.msra.mxu0 0.0
        %1352 = vmatprep.subr.mxu0 0.0
        %1353 = vmatpush1.msra.mxu0 0.0
        %1354 = vmatprep.subr.mxu0 0.0
        %1355 = vmatpush1.msra.mxu0 0.0
        %1356 = vmatprep.subr.mxu0 0.0
        %1357 = vmatpush1.msra.mxu0 0.0
        %1358 = vmatprep.subr.mxu0 0.0
        %1359 = vmatpush1.msra.mxu0 0.0
        %1360 = vmatprep.subr.mxu0 0.0
        %1361 = vmatpush1.msra.mxu0 0.0
        %1362 = vmatprep.subr.mxu0 0.0
        %1363 = vmatpush1.msra.mxu0 0.0
        %1364 = vmatprep.subr.mxu0 0.0
        %1365 = vmatpush1.msra.mxu0 0.0
        %1366 = vmatprep.subr.mxu0 0.0
        %1367 = vmatpush1.msra.mxu0 0.0
        %1368 = vmatprep.subr.mxu0 0.0
        %1369 = vmatpush1.msra.mxu0 0.0
        %1370 = vmatprep.subr.mxu0 0.0
        %1371 = vmatpush1.msra.mxu0 0.0
        %1372 = vmatprep.subr.mxu0 0.0
        %1373 = vmatpush1.msra.mxu0 0.0
        %1374 = vmatprep.subr.mxu0 %v1338
        %1375 = vmatpush1.msra.mxu0 %v1337
        %1376 = vmatprep.subr.mxu0 0.0
        %1377 = vmatpush2.msra.mxu0 0.0
        %1378 = vmatprep.subr.mxu0 0.0
        %1379 = vmatpush2.msra.mxu0 0.0
        %1380 = vmatprep.subr.mxu0 0.0
        %1381 = vmatpush2.msra.mxu0 0.0
        %1382 = vmatprep.subr.mxu0 0.0
        %1383 = vmatpush2.msra.mxu0 0.0
        %1384 = vmatprep.subr.mxu0 0.0
        %1385 = vmatpush2.msra.mxu0 0.0
        %1386 = vmatprep.subr.mxu0 0.0
        %1387 = vmatpush2.msra.mxu0 0.0
        %1388 = vmatprep.subr.mxu0 0.0
        %1389 = vmatpush2.msra.mxu0 0.0
        %1390 = vmatprep.subr.mxu0 0.0
        %1391 = vmatpush2.msra.mxu0 0.0
        %1392 = vmatprep.subr.mxu0 0.0
        %1393 = vmatpush2.msra.mxu0 0.0
        %1394 = vmatprep.subr.mxu0 0.0
        %1395 = vmatpush2.msra.mxu0 0.0
        %1396 = vmatprep.subr.mxu0 0.0
        %1397 = vmatpush2.msra.mxu0 0.0
        %1398 = vmatprep.subr.mxu0 0.0
        %1399 = vmatpush2.msra.mxu0 0.0
        %1400 = vmatprep.subr.mxu0 0.0
        %1401 = vmatpush2.msra.mxu0 0.0
        %1402 = vmatprep.subr.mxu0 0.0
        %1403 = vmatpush2.msra.mxu0 0.0
        %1404 = vmatprep.subr.mxu0 0.0
        %1405 = vmatpush2.msra.mxu0 0.0
        %1406 = vmatprep.subr.mxu0 0.0
        %1407 = vmatpush2.msra.mxu0 0.0
        %1408 = vmatprep.mubr.f32.mxu0 0.0
        %1409 = vmatmul.mubr.f32.gmra.mxu0 %v1342
        %v1410 = vpop.f32.mrf.mxu0
        %v1411 = vadd.f32 0.0, %v1410
        %v1412 = vpop.f32.mrf.mxu0
        %v1413 = vadd.f32 0.0, %v1412
        %1414 = vdwg.mxu0
        %1415 = vmatprep.subr.mxu0 0.0
        %1416 = vmatpush1.msra.mxu0 0.0
        %1417 = vmatprep.subr.mxu0 0.0
        %1418 = vmatpush1.msra.mxu0 0.0
        %1419 = vmatprep.subr.mxu0 0.0
        %1420 = vmatpush1.msra.mxu0 0.0
        %1421 = vmatprep.subr.mxu0 0.0
        %1422 = vmatpush1.msra.mxu0 0.0
        %1423 = vmatprep.subr.mxu0 0.0
        %1424 = vmatpush1.msra.mxu0 0.0
        %1425 = vmatprep.subr.mxu0 0.0
        %1426 = vmatpush1.msra.mxu0 0.0
        %1427 = vmatprep.subr.mxu0 0.0
        %1428 = vmatpush1.msra.mxu0 0.0
        %1429 = vmatprep.subr.mxu0 0.0
        %1430 = vmatpush1.msra.mxu0 0.0
        %1431 = vmatprep.subr.mxu0 0.0
        %1432 = vmatpush1.msra.mxu0 0.0
        %1433 = vmatprep.subr.mxu0 0.0
        %1434 = vmatpush1.msra.mxu0 0.0
        %1435 = vmatprep.subr.mxu0 0.0
        %1436 = vmatpush1.msra.mxu0 0.0
        %1437 = vmatprep.subr.mxu0 0.0
        %1438 = vmatpush1.msra.mxu0 0.0
        %1439 = vmatprep.subr.mxu0 0.0
        %1440 = vmatpush1.msra.mxu0 0.0
        %1441 = vmatprep.subr.mxu0 0.0
        %1442 = vmatpush1.msra.mxu0 0.0
        %1443 = vmatprep.subr.mxu0 0.0
        %1444 = vmatpush1.msra.mxu0 0.0
        %1445 = vmatprep.subr.mxu0 0.0
        %1446 = vmatpush1.msra.mxu0 %v1335
        %1447 = vmatprep.subr.mxu0 0.0
        %1448 = vmatpush2.msra.mxu0 0.0
        %1449 = vmatprep.subr.mxu0 0.0
        %1450 = vmatpush2.msra.mxu0 0.0
        %1451 = vmatprep.subr.mxu0 0.0
        %1452 = vmatpush2.msra.mxu0 0.0
        %1453 = vmatprep.subr.mxu0 0.0
        %1454 = vmatpush2.msra.mxu0 0.0
        %1455 = vmatprep.subr.mxu0 0.0
        %1456 = vmatpush2.msra.mxu0 0.0
        %1457 = vmatprep.subr.mxu0 0.0
        %1458 = vmatpush2.msra.mxu0 0.0
        %1459 = vmatprep.subr.mxu0 0.0
        %1460 = vmatpush2.msra.mxu0 0.0
        %1461 = vmatprep.subr.mxu0 0.0
        %1462 = vmatpush2.msra.mxu0 0.0
        %1463 = vmatprep.subr.mxu0 0.0
        %1464 = vmatpush2.msra.mxu0 0.0
        %1465 = vmatprep.subr.mxu0 0.0
        %1466 = vmatpush2.msra.mxu0 0.0
        %1467 = vmatprep.subr.mxu0 0.0
        %1468 = vmatpush2.msra.mxu0 0.0
        %1469 = vmatprep.subr.mxu0 0.0
        %1470 = vmatpush2.msra.mxu0 0.0
        %1471 = vmatprep.subr.mxu0 0.0
        %1472 = vmatpush2.msra.mxu0 0.0
        %1473 = vmatprep.subr.mxu0 0.0
        %1474 = vmatpush2.msra.mxu0 0.0
        %1475 = vmatprep.subr.mxu0 0.0
        %1476 = vmatpush2.msra.mxu0 0.0
        %1477 = vmatprep.subr.mxu0 0.0
        %1478 = vmatpush2.msra.mxu0 0.0
        %1479 = vmatprep.mubr.f32.mxu0 0.0
        %1480 = vmatmul.mubr.f32.gmra.mxu0 %v1342
        %v1481 = vpop.f32.mrf.mxu0
        %v1482 = vadd.f32 0.0, %v1481
        %v1483 = vpop.f32.mrf.mxu0
        %1484 = vdwg.mxu0
        %v1485 = vadd.f32 %v1325, %v1411
        %v1486 = vadd.f32 %v1326, %v1413
        %v1487 = vadd.f32 %v1327, %v1482
        %1488 = vrot.lane.b32.xlu0 %v222, 64
        %v1489 = vpop.permute.xlu0 %1488
        %1490 = vrot.lane.b32.xlu0 %v219, 90
        %v1491 = vpop.permute.xlu0 %1490
        %1492 = vrot.lane.b32.xlu0 %v220, 90
        %v1493 = vpop.permute.xlu0 %1492
        %1494 = vrot.lane.b32.xlu0 %v221, 90
        %v1495 = vpop.permute.xlu0 %1494
        %vm1496 = vcmask 736256
        %v1497 = vsel %vm1496, %v1491, %v1493
        %v1498 = vsel %vm1496, %v1493, %v1495
        %v1502 = vsel %vm241, %v1489, 0
        %1504 = vmatprep.subr.mxu0 0.0
        %1505 = vmatpush1.msra.mxu0 0.0
        %1506 = vmatprep.subr.mxu0 0.0
        %1507 = vmatpush1.msra.mxu0 0.0
        %1508 = vmatprep.subr.mxu0 0.0
        %1509 = vmatpush1.msra.mxu0 0.0
        %1510 = vmatprep.subr.mxu0 0.0
        %1511 = vmatpush1.msra.mxu0 0.0
        %1512 = vmatprep.subr.mxu0 0.0
        %1513 = vmatpush1.msra.mxu0 0.0
        %1514 = vmatprep.subr.mxu0 0.0
        %1515 = vmatpush1.msra.mxu0 0.0
        %1516 = vmatprep.subr.mxu0 0.0
        %1517 = vmatpush1.msra.mxu0 0.0
        %1518 = vmatprep.subr.mxu0 0.0
        %1519 = vmatpush1.msra.mxu0 0.0
        %1520 = vmatprep.subr.mxu0 0.0
        %1521 = vmatpush1.msra.mxu0 0.0
        %1522 = vmatprep.subr.mxu0 0.0
        %1523 = vmatpush1.msra.mxu0 0.0
        %1524 = vmatprep.subr.mxu0 0.0
        %1525 = vmatpush1.msra.mxu0 0.0
        %1526 = vmatprep.subr.mxu0 0.0
        %1527 = vmatpush1.msra.mxu0 0.0
        %1528 = vmatprep.subr.mxu0 0.0
        %1529 = vmatpush1.msra.mxu0 0.0
        %1530 = vmatprep.subr.mxu0 0.0
        %1531 = vmatpush1.msra.mxu0 0.0
        %1532 = vmatprep.subr.mxu0 0.0
        %1533 = vmatpush1.msra.mxu0 0.0
        %1534 = vmatprep.subr.mxu0 %v1498
        %1535 = vmatpush1.msra.mxu0 %v1497
        %1536 = vmatprep.subr.mxu0 0.0
        %1537 = vmatpush2.msra.mxu0 0.0
        %1538 = vmatprep.subr.mxu0 0.0
        %1539 = vmatpush2.msra.mxu0 0.0
        %1540 = vmatprep.subr.mxu0 0.0
        %1541 = vmatpush2.msra.mxu0 0.0
        %1542 = vmatprep.subr.mxu0 0.0
        %1543 = vmatpush2.msra.mxu0 0.0
        %1544 = vmatprep.subr.mxu0 0.0
        %1545 = vmatpush2.msra.mxu0 0.0
        %1546 = vmatprep.subr.mxu0 0.0
        %1547 = vmatpush2.msra.mxu0 0.0
        %1548 = vmatprep.subr.mxu0 0.0
        %1549 = vmatpush2.msra.mxu0 0.0
        %1550 = vmatprep.subr.mxu0 0.0
        %1551 = vmatpush2.msra.mxu0 0.0
        %1552 = vmatprep.subr.mxu0 0.0
        %1553 = vmatpush2.msra.mxu0 0.0
        %1554 = vmatprep.subr.mxu0 0.0
        %1555 = vmatpush2.msra.mxu0 0.0
        %1556 = vmatprep.subr.mxu0 0.0
        %1557 = vmatpush2.msra.mxu0 0.0
        %1558 = vmatprep.subr.mxu0 0.0
        %1559 = vmatpush2.msra.mxu0 0.0
        %1560 = vmatprep.subr.mxu0 0.0
        %1561 = vmatpush2.msra.mxu0 0.0
        %1562 = vmatprep.subr.mxu0 0.0
        %1563 = vmatpush2.msra.mxu0 0.0
        %1564 = vmatprep.subr.mxu0 0.0
        %1565 = vmatpush2.msra.mxu0 0.0
        %1566 = vmatprep.subr.mxu0 0.0
        %1567 = vmatpush2.msra.mxu0 0.0
        %1568 = vmatprep.mubr.f32.mxu0 0.0
        %1569 = vmatmul.mubr.f32.gmra.mxu0 %v1502
        %v1570 = vpop.f32.mrf.mxu0
        %v1571 = vadd.f32 0.0, %v1570
        %v1572 = vpop.f32.mrf.mxu0
        %v1573 = vadd.f32 0.0, %v1572
        %1574 = vdwg.mxu0
        %1575 = vmatprep.subr.mxu0 0.0
        %1576 = vmatpush1.msra.mxu0 0.0
        %1577 = vmatprep.subr.mxu0 0.0
        %1578 = vmatpush1.msra.mxu0 0.0
        %1579 = vmatprep.subr.mxu0 0.0
        %1580 = vmatpush1.msra.mxu0 0.0
        %1581 = vmatprep.subr.mxu0 0.0
        %1582 = vmatpush1.msra.mxu0 0.0
        %1583 = vmatprep.subr.mxu0 0.0
        %1584 = vmatpush1.msra.mxu0 0.0
        %1585 = vmatprep.subr.mxu0 0.0
        %1586 = vmatpush1.msra.mxu0 0.0
        %1587 = vmatprep.subr.mxu0 0.0
        %1588 = vmatpush1.msra.mxu0 0.0
        %1589 = vmatprep.subr.mxu0 0.0
        %1590 = vmatpush1.msra.mxu0 0.0
        %1591 = vmatprep.subr.mxu0 0.0
        %1592 = vmatpush1.msra.mxu0 0.0
        %1593 = vmatprep.subr.mxu0 0.0
        %1594 = vmatpush1.msra.mxu0 0.0
        %1595 = vmatprep.subr.mxu0 0.0
        %1596 = vmatpush1.msra.mxu0 0.0
        %1597 = vmatprep.subr.mxu0 0.0
        %1598 = vmatpush1.msra.mxu0 0.0
        %1599 = vmatprep.subr.mxu0 0.0
        %1600 = vmatpush1.msra.mxu0 0.0
        %1601 = vmatprep.subr.mxu0 0.0
        %1602 = vmatpush1.msra.mxu0 0.0
        %1603 = vmatprep.subr.mxu0 0.0
        %1604 = vmatpush1.msra.mxu0 0.0
        %1605 = vmatprep.subr.mxu0 0.0
        %1606 = vmatpush1.msra.mxu0 %v1495
        %1607 = vmatprep.subr.mxu0 0.0
        %1608 = vmatpush2.msra.mxu0 0.0
        %1609 = vmatprep.subr.mxu0 0.0
        %1610 = vmatpush2.msra.mxu0 0.0
        %1611 = vmatprep.subr.mxu0 0.0
        %1612 = vmatpush2.msra.mxu0 0.0
        %1613 = vmatprep.subr.mxu0 0.0
        %1614 = vmatpush2.msra.mxu0 0.0
        %1615 = vmatprep.subr.mxu0 0.0
        %1616 = vmatpush2.msra.mxu0 0.0
        %1617 = vmatprep.subr.mxu0 0.0
        %1618 = vmatpush2.msra.mxu0 0.0
        %1619 = vmatprep.subr.mxu0 0.0
        %1620 = vmatpush2.msra.mxu0 0.0
        %1621 = vmatprep.subr.mxu0 0.0
        %1622 = vmatpush2.msra.mxu0 0.0
        %1623 = vmatprep.subr.mxu0 0.0
        %1624 = vmatpush2.msra.mxu0 0.0
        %1625 = vmatprep.subr.mxu0 0.0
        %1626 = vmatpush2.msra.mxu0 0.0
        %1627 = vmatprep.subr.mxu0 0.0
        %1628 = vmatpush2.msra.mxu0 0.0
        %1629 = vmatprep.subr.mxu0 0.0
        %1630 = vmatpush2.msra.mxu0 0.0
        %1631 = vmatprep.subr.mxu0 0.0
        %1632 = vmatpush2.msra.mxu0 0.0
        %1633 = vmatprep.subr.mxu0 0.0
        %1634 = vmatpush2.msra.mxu0 0.0
        %1635 = vmatprep.subr.mxu0 0.0
        %1636 = vmatpush2.msra.mxu0 0.0
        %1637 = vmatprep.subr.mxu0 0.0
        %1638 = vmatpush2.msra.mxu0 0.0
        %1639 = vmatprep.mubr.f32.mxu0 0.0
        %1640 = vmatmul.mubr.f32.gmra.mxu0 %v1502
        %v1641 = vpop.f32.mrf.mxu0
        %v1642 = vadd.f32 0.0, %v1641
        %v1643 = vpop.f32.mrf.mxu0
        %1644 = vdwg.mxu0
        %v1645 = vadd.f32 %v1485, %v1571
        %v1646 = vadd.f32 %v1486, %v1573
        %v1647 = vadd.f32 %v1487, %v1642
        %v1648 = vld [vmem:[%s2] sm:$0x7]
        %v1650 = vlaneseq
        %v1651 = vshrl.u32 %v1650, 7
        %v1652 = vsub.s32 0, %v1651
        %v1653 = vrot.slane %v1648, %v1652
        %v1654 = vlaneseq
        %v1655 = vshrl.u32 %v1654, 7
        %v1656 = vsub.s32 1, %v1655
        %v1657 = vrot.slane %v1648, %v1656
        %v1658 = vlaneseq
        %v1659 = vshrl.u32 %v1658, 7
        %v1660 = vsub.s32 2, %v1659
        %v1661 = vrot.slane %v1648, %v1660
        %v1665 = vmul.f32 %v1645, %v1653
        %v1666 = vmul.f32 %v1646, %v1657
        %v1667 = vmul.f32 %v1647, %v1661
        %v1668 = vld [vmem:[%s3] sm:$0xf]
        %vm1669 = vcmask 1043456
        %v1670 = vsel %vm1669, %v1665, 0.0
        %v1671 = vsel %vm1669, %v1666, 0.0
        %v1672 = vadd.f32 %v1670, %v1671
        %vm1673 = vcmask 257024
        %v1674 = vsel %vm1673, %v1667, 0.0
        %v1675 = vadd.f32 %v1672, %v1674
        %1676 = vadd.xlane.f32.xlu0 %v1675
        %v1677 = vpop.xlane.xlu0 %1676
        %v1678 = vadd.f32 %v1668, %v1677
        %vm1679 = vcmask 3072
        %1680 = vst.msk [vmem:[%s3] sm:$0xf] %vm1679, %v1678
        %v1681 = vld [vmem:[%s4] sm:$0xf]
        %v1682 = vmul.f32 %v1665, %v1665
        %v1683 = vmul.f32 %v1666, %v1666
        %v1684 = vmul.f32 %v1667, %v1667
        %v1685 = vsel %vm1669, %v1682, 0.0
        %v1686 = vsel %vm1669, %v1683, 0.0
        %v1687 = vadd.f32 %v1685, %v1686
        %v1688 = vsel %vm1673, %v1684, 0.0
        %v1689 = vadd.f32 %v1687, %v1688
        %1690 = vadd.xlane.f32.xlu0 %v1689
        %v1691 = vpop.xlane.xlu0 %1690
        %v1692 = vadd.f32 %v1681, %v1691
        %1693 = vst.msk [vmem:[%s4] sm:$0xf] %vm1679, %v1692
        // Predicated region
        $region45: #{tpu_custom_call.1} parent=31 // pred_check
          %p1694 = pneg %p101
        $region46: #{tpu_custom_call.1} parent=31 // pred_check_branch
          %1696 = sbr.rel (%p1694) target = $region48
        $region47: #{tpu_custom_call.1} parent=31 // pred_region
          _
        $region48: #{tpu_custom_call.1} parent=31 // pred_fallthru
          _
        // Predicated region
        $region49: #{tpu_custom_call.1} parent=31 // pred_check
          %p1697 = pneg %p122
        $region50: #{tpu_custom_call.1} parent=31 // pred_check_branch
          %1699 = sbr.rel (%p1697) target = $region52
        $region51: #{tpu_custom_call.1} parent=31 // pred_region
          _
        $region52: #{tpu_custom_call.1} parent=31 // pred_fallthru
          _
        // Predicated region
        $region53: #{tpu_custom_call.1} parent=31 // pred_check
          %p1700 = pneg %p101
        $region54: #{tpu_custom_call.1} parent=31 // pred_check_branch
          %1702 = sbr.rel (%p1700) target = $region56
        $region55: #{tpu_custom_call.1} parent=31 // pred_region
          _
        $region56: #{tpu_custom_call.1} parent=31 // pred_fallthru
          _
        // Predicated region
        $region57: #{tpu_custom_call.1} parent=31 // pred_check
          %p1703 = pneg %p122
        $region58: #{tpu_custom_call.1} parent=31 // pred_check_branch
          %1705 = sbr.rel (%p1703) target = $region60
        $region59: #{tpu_custom_call.1} parent=31 // pred_region
          _
        $region60: #{tpu_custom_call.1} parent=31 // pred_fallthru
          _
      $region32: #{tpu_custom_call.1} parent=5 // pred_fallthru
        _
      %p1706 = scmp.le.s32.totalorder 2, %s15
      // Predicated region
      $region61: #{tpu_custom_call.1} parent=5 // pred_check
        %p1707 = pneg %p1706
      $region62: #{tpu_custom_call.1} parent=5 // pred_check_branch
        %1709 = sbr.rel (%p1707) target = $region64
      $region63: #{tpu_custom_call.1} parent=5 // pred_region
        %s1710 = ssub.s32 %s15, 2
      $region64: #{tpu_custom_call.1} parent=5 // pred_fallthru
        _
    $region6: #{tpu_custom_call.1} parent=1 // loop_footer
      %s19 = sadd.s32 1, %s15
    $region7: #{tpu_custom_call.1} parent=1 // loop_footer_branch
      %14 = sbr.rel target = $region3
    $region8: #{tpu_custom_call.1} parent=1 // loop_exit
      _
    %1711 = vsyncpa [#allocation3], 1
    %s1712 = scalar_lea.sflag [#allocation3], 1
    %1713 = vsyncpa %s1712, 1
    %1714 = vsyncpa [#allocation5], 1

</llo_original>
